<compile_context>
chip_gen: v5e
topology: v5e:2x2
jax: 0.10.0
libtpu: 0.0.40
codegen_flags: <defaults>
</compile_context>

<pallas_src>
import functools

import jax
import jax.numpy as jnp
from jax import lax
from jax.experimental import pallas as pl
from jax.experimental.pallas import tpu as pltpu

KSIZE = 7
PAD = 3
NTAPS = KSIZE * KSIZE
NACC = 4  # independent partial accumulators in the tap loop (ILP)


def _spatial_attention_kernel(x_ref, w_ref, m_ref, o_ref, *, H, W, C):
    """Processes one batch tile.

    x_ref : (bb, C, H*W) VMEM   lane-dense input block (input dtype)
    w_ref : (2*49,) f32  SMEM   flattened conv weight: [avg-channel taps | max-channel taps]
    m_ref : (49, H*W) f32 VMEM  precomputed {0,1} destination border masks (one row per tap)
    o_ref : (bb, C, H*W) VMEM   lane-dense output block
    """
    HW = H * W

    # Channel statistics straight from the ref: f32 accumulation on the
    # reductions only, no full-tensor f32 copy kept live across the tap loop.
    xs = x_ref[...]                                            # (bb, C, HW)
    avg = jnp.sum(xs, axis=1, dtype=jnp.float32) * jnp.float32(1.0 / C)  # (bb, HW)
    mx = jnp.max(xs, axis=1).astype(jnp.float32)                         # (bb, HW)
    bb = avg.shape[0]

    # 7x7 "same" conv over the 2-channel (avg, max) map in flattened layout.
    # Per tap: scalar*vector combine (VPU, weights from SMEM), a single lane
    # roll shared by both channels (XLU slot), then a {0,1}-mask
    # multiply-accumulate (mask load lands on a spare vld slot; no compares or
    # selects in the inner loop).  Round-robin over NACC partial accumulators
    # so the VLIW scheduler can co-issue taps.
    accs = [jnp.zeros((bb, HW), jnp.float32) for _ in range(NACC)]
    for t in range(NTAPS):
        ky, kx = divmod(t, KSIZE)
        wa = w_ref[t]                                 # SMEM scalar (avg tap)
        wm = w_ref[NTAPS + t]                         # SMEM scalar (max tap)
        comb = wa * avg + wm * mx                     # (bb, HW)
        off = (ky - PAD) * W + (kx - PAD)             # static tap offset
        shift = (-off) % HW
        rolled = comb if shift == 0 else pltpu.roll(comb, shift=shift, axis=1)
        mask = m_ref[pl.ds(t, 1), :]                  # (1, HW) {0,1} float
        accs[t % NACC] = accs[t % NACC] + mask * rolled
    acc = (accs[0] + accs[1]) + (accs[2] + accs[3])

    att = jax.nn.sigmoid(acc)                         # (bb, HW) f32
    # Re-read x for the epilogue multiply in the input dtype (short live range,
    # no f32 blow-up of the working set for sub-32-bit inputs).
    o_ref[...] = (x_ref[...] * att[:, None, :].astype(x_ref.dtype)).astype(o_ref.dtype)


def _pad8(n):
    return -(-n // 8) * 8


def _chip_info():
    """Best-effort (VMEM capacity, is-two-TensorCore-chip); safe fallbacks."""
    vmem_bytes = 64 << 20            # conservative default (v7x per-TC VMEM)
    two_tc = False
    try:
        vmem_bytes = int(pltpu.get_tpu_info().vmem_capacity_bytes)
    except Exception:
        pass
    try:
        kind = jax.devices()[0].device_kind.lower()
        two_tc = ("v7" in kind) or ("7x" in kind)
    except Exception:
        pass
    return vmem_bytes, two_tc


def use_attention_model(x, conv_weight):
    """x: (B, C, H, W); conv_weight: (1, 2, 7, 7) -> (B, C, H, W)."""
    B, C, H, W = x.shape
    HW = H * W
    itemsize = jnp.dtype(x.dtype).itemsize

    xf = x.reshape(B, C, HW)                                   # contiguous: free
    w_flat = conv_weight.astype(jnp.float32).reshape(2 * NTAPS)

    # Precompute the 49 destination border masks as {0,1} floats (one row per
    # tap): replaces 14 compares + AND + select per tap with one mask load and
    # a multiply-accumulate inside the kernel.
    pix = jnp.arange(HW, dtype=jnp.int32)
    row = pix // W
    col = pix % W
    mask_rows = []
    for ky in range(KSIZE):
        for kx in range(KSIZE):
            m = ((row >= PAD - ky) & (row < H + PAD - ky) &
                 (col >= PAD - kx) & (col < W + PAD - kx))
            mask_rows.append(m)
    mask49 = jnp.stack(mask_rows, axis=0).astype(jnp.float32)  # (49, HW)

    vmem_bytes, two_tc = _chip_info()

    # Batch tile: pack batch elements per grid step up to a generation-aware
    # VMEM budget.  Account for C -> 8 sublane padding of the x / out blocks.
    padded_c = _pad8(C)
    per_elem = 2 * padded_c * HW * itemsize                    # x block + out block
    budget = (8 << 20) if vmem_bytes >= (128 << 20) else (4 << 20)
    bb = max(1, min(B, budget // max(per_elem, 1)))
    if bb >= 8:
        bb = (bb // 8) * 8                                     # full sublanes in the tap loop
    if two_tc and B >= 2:
        bb = min(bb, max(1, B // 2))                           # >=2 grid steps: use both TCs
    while B % bb:
        bb -= 1

    # VMEM accounting: double-buffered x/out blocks + double-buffered mask
    # block + in-kernel f32 intermediates (avg/mx/4 accs/comb/rolled/att) + slack.
    # TODO(synk): if a single batch element's padded (C, H*W) slab exceeds VMEM
    # (notably v7x's 64 MiB), switch to a two-phase kernel that tiles over C.
    io_block = 2 * bb * padded_c * HW * itemsize
    mask_block = _pad8(NTAPS) * HW * 4
    interm = 14 * _pad8(bb) * HW * 4
    needed = 2 * io_block + 2 * mask_block + interm + (2 << 20)

    cp_kwargs = dict(dimension_semantics=("parallel",))
    if needed > (16 << 20):                                    # v5e default scoped limit
        cp_kwargs["vmem_limit_bytes"] = int(min(needed, vmem_bytes - (8 << 20)))

    kernel = pl.pallas_call(
        functools.partial(_spatial_attention_kernel, H=H, W=W, C=C),
        out_shape=jax.ShapeDtypeStruct((B, C, HW), x.dtype),
        grid_spec=pltpu.PrefetchScalarGridSpec(
            num_scalar_prefetch=0,
            grid=(B // bb,),
            in_specs=[
                pl.BlockSpec((bb, C, HW), lambda b: (b, 0, 0)),
                pl.BlockSpec(memory_space=pltpu.MemorySpace.SMEM),
                pl.BlockSpec((NTAPS, HW), lambda b: (0, 0)),
            ],
            out_specs=pl.BlockSpec((bb, C, HW), lambda b: (b, 0, 0)),
        ),
        compiler_params=pltpu.CompilerParams(**cp_kwargs),
    )
    out = kernel(xf, w_flat, mask49)
    return out.reshape(B, C, H, W)


def _reference(x, conv_weight):
    """Pure-JAX reference matching the PyTorch forward."""
    avg_out = jnp.mean(x, axis=1, keepdims=True)
    max_out = jnp.max(x, axis=1, keepdims=True)
    feat = jnp.concatenate([avg_out, max_out], axis=1)         # (B, 2, H, W)
    conv = lax.conv_general_dilated(
        feat, conv_weight, window_strides=(1, 1),
        padding=((PAD, PAD), (PAD, PAD)),
        dimension_numbers=("NCHW", "OIHW", "NCHW"))
    att = jax.nn.sigmoid(conv)                                 # (B, 1, H, W)
    return x * att


if __name__ == "__main__":
    key = jax.random.PRNGKey(0)
    kx_, kw_ = jax.random.split(key)

    B, C, H, W = 2, 4, 16, 16
    x = jax.random.normal(kx_, (B, C, H, W), dtype=jnp.float32)
    # Deterministic conv weight, same shape as nn.Conv2d(2, 1, 7, bias=False).weight
    conv_weight = (0.05 * jax.random.normal(kw_, (1, 2, KSIZE, KSIZE),
                                            dtype=jnp.float32))

    out = use_attention_model(x, conv_weight)
    out = jax.block_until_ready(out)

    ref = _reference(x, conv_weight)
    assert out.shape == (B, C, H, W)
    assert jnp.allclose(out, ref, atol=1e-5, rtol=1e-5), (
        float(jnp.max(jnp.abs(out - ref))))

    print("KERNEL_OK")
</pallas_src>

<mosaic_0001>
module attributes {stable_mosaic.version = 11 : i64} {
  func.func @_spatial_attention_kernel(%arg0: i32, %arg1: memref<2x4x256xf32, #tpu.memory_space<vmem>>, %arg2: memref<98xf32, #tpu.memory_space<smem>>, %arg3: memref<49x256xf32, #tpu.memory_space<vmem>>, %arg4: memref<2x4x256xf32, #tpu.memory_space<vmem>>) attributes {dimension_semantics = [#tpu.dimension_semantics<parallel>], iteration_bounds = array<i64: 1>, scalar_prefetch = 0 : i64, scratch_operands = 0 : i64, tpu.core_type = #tpu.core_type<tc>, window_params = [{transform_indices = @transform_0, window_bounds = array<i64: 2, 4, 256>}, {transform_indices = @transform_1, window_bounds = array<i64: 98>}, {pipeline_mode = #tpu.pipeline_mode<synchronous>, transform_indices = @transform_2, window_bounds = array<i64: 49, 256>}, {transform_indices = @transform_3, window_bounds = array<i64: 2, 4, 256>}]} {
    %c0 = arith.constant 0 : index
    %c0_0 = arith.constant 0 : index
    %c0_1 = arith.constant 0 : index
    %0 = vector.load %arg1[%c0, %c0_0, %c0_1] : memref<2x4x256xf32, #tpu.memory_space<vmem>>, vector<2x4x256xf32>
    %cst = arith.constant dense<0.000000e+00> : vector<2x256xf32>
    %1 = vector.multi_reduction <add>, %0, %cst [1] : vector<2x4x256xf32> to vector<2x256xf32>
    %cst_2 = arith.constant 2.500000e-01 : f32
    %2 = vector.broadcast %cst_2 : f32 to vector<2x256xf32>
    %3 = arith.mulf %1, %2 : vector<2x256xf32>
    %cst_3 = arith.constant dense<0xFF800000> : vector<2x256xf32>
    %4 = vector.multi_reduction <maximumf>, %0, %cst_3 [1] : vector<2x4x256xf32> to vector<2x256xf32>
    %cst_4 = arith.constant 0.000000e+00 : f32
    %5 = vector.broadcast %cst_4 : f32 to vector<2x256xf32>
    %cst_5 = arith.constant 0.000000e+00 : f32
    %6 = vector.broadcast %cst_5 : f32 to vector<2x256xf32>
    %cst_6 = arith.constant 0.000000e+00 : f32
    %7 = vector.broadcast %cst_6 : f32 to vector<2x256xf32>
    %cst_7 = arith.constant 0.000000e+00 : f32
    %8 = vector.broadcast %cst_7 : f32 to vector<2x256xf32>
    %c0_8 = arith.constant 0 : index
    %9 = memref.load %arg2[%c0_8] : memref<98xf32, #tpu.memory_space<smem>>
    %c49 = arith.constant 49 : index
    %10 = memref.load %arg2[%c49] : memref<98xf32, #tpu.memory_space<smem>>
    %11 = vector.broadcast %9 : f32 to vector<2x256xf32>
    %12 = arith.mulf %11, %3 : vector<2x256xf32>
    %13 = vector.broadcast %10 : f32 to vector<2x256xf32>
    %14 = arith.mulf %13, %4 : vector<2x256xf32>
    %15 = arith.addf %12, %14 : vector<2x256xf32>
    %c51_i32 = arith.constant 51 : i32
    %16 = tpu.dynamic_rotate %15 by %c51_i32 dim 1 : vector<2x256xf32>, i32 -> vector<2x256xf32>
    %c0_9 = arith.constant 0 : index
    %c0_10 = arith.constant 0 : index
    %17 = vector.load %arg3[%c0_9, %c0_10] : memref<49x256xf32, #tpu.memory_space<vmem>>, vector<1x256xf32>
    %18 = vector.broadcast %17 : vector<1x256xf32> to vector<2x256xf32>
    %19 = arith.mulf %18, %16 : vector<2x256xf32>
    %20 = arith.addf %5, %19 : vector<2x256xf32>
    %c1 = arith.constant 1 : index
    %21 = memref.load %arg2[%c1] : memref<98xf32, #tpu.memory_space<smem>>
    %c50 = arith.constant 50 : index
    %22 = memref.load %arg2[%c50] : memref<98xf32, #tpu.memory_space<smem>>
    %23 = vector.broadcast %21 : f32 to vector<2x256xf32>
    %24 = arith.mulf %23, %3 : vector<2x256xf32>
    %25 = vector.broadcast %22 : f32 to vector<2x256xf32>
    %26 = arith.mulf %25, %4 : vector<2x256xf32>
    %27 = arith.addf %24, %26 : vector<2x256xf32>
    %c50_i32 = arith.constant 50 : i32
    %28 = tpu.dynamic_rotate %27 by %c50_i32 dim 1 : vector<2x256xf32>, i32 -> vector<2x256xf32>
    %c1_11 = arith.constant 1 : index
    %c0_12 = arith.constant 0 : index
    %29 = vector.load %arg3[%c1_11, %c0_12] : memref<49x256xf32, #tpu.memory_space<vmem>>, vector<1x256xf32>
    %30 = vector.broadcast %29 : vector<1x256xf32> to vector<2x256xf32>
    %31 = arith.mulf %30, %28 : vector<2x256xf32>
    %32 = arith.addf %6, %31 : vector<2x256xf32>
    %c2 = arith.constant 2 : index
    %33 = memref.load %arg2[%c2] : memref<98xf32, #tpu.memory_space<smem>>
    %c51 = arith.constant 51 : index
    %34 = memref.load %arg2[%c51] : memref<98xf32, #tpu.memory_space<smem>>
    %35 = vector.broadcast %33 : f32 to vector<2x256xf32>
    %36 = arith.mulf %35, %3 : vector<2x256xf32>
    %37 = vector.broadcast %34 : f32 to vector<2x256xf32>
    %38 = arith.mulf %37, %4 : vector<2x256xf32>
    %39 = arith.addf %36, %38 : vector<2x256xf32>
    %c49_i32 = arith.constant 49 : i32
    %40 = tpu.dynamic_rotate %39 by %c49_i32 dim 1 : vector<2x256xf32>, i32 -> vector<2x256xf32>
    %c2_13 = arith.constant 2 : index
    %c0_14 = arith.constant 0 : index
    %41 = vector.load %arg3[%c2_13, %c0_14] : memref<49x256xf32, #tpu.memory_space<vmem>>, vector<1x256xf32>
    %42 = vector.broadcast %41 : vector<1x256xf32> to vector<2x256xf32>
    %43 = arith.mulf %42, %40 : vector<2x256xf32>
    %44 = arith.addf %7, %43 : vector<2x256xf32>
    %c3 = arith.constant 3 : index
    %45 = memref.load %arg2[%c3] : memref<98xf32, #tpu.memory_space<smem>>
    %c52 = arith.constant 52 : index
    %46 = memref.load %arg2[%c52] : memref<98xf32, #tpu.memory_space<smem>>
    %47 = vector.broadcast %45 : f32 to vector<2x256xf32>
    %48 = arith.mulf %47, %3 : vector<2x256xf32>
    %49 = vector.broadcast %46 : f32 to vector<2x256xf32>
    %50 = arith.mulf %49, %4 : vector<2x256xf32>
    %51 = arith.addf %48, %50 : vector<2x256xf32>
    %c48_i32 = arith.constant 48 : i32
    %52 = tpu.dynamic_rotate %51 by %c48_i32 dim 1 : vector<2x256xf32>, i32 -> vector<2x256xf32>
    %c3_15 = arith.constant 3 : index
    %c0_16 = arith.constant 0 : index
    %53 = vector.load %arg3[%c3_15, %c0_16] : memref<49x256xf32, #tpu.memory_space<vmem>>, vector<1x256xf32>
    %54 = vector.broadcast %53 : vector<1x256xf32> to vector<2x256xf32>
    %55 = arith.mulf %54, %52 : vector<2x256xf32>
    %56 = arith.addf %8, %55 : vector<2x256xf32>
    %c4 = arith.constant 4 : index
    %57 = memref.load %arg2[%c4] : memref<98xf32, #tpu.memory_space<smem>>
    %c53 = arith.constant 53 : index
    %58 = memref.load %arg2[%c53] : memref<98xf32, #tpu.memory_space<smem>>
    %59 = vector.broadcast %57 : f32 to vector<2x256xf32>
    %60 = arith.mulf %59, %3 : vector<2x256xf32>
    %61 = vector.broadcast %58 : f32 to vector<2x256xf32>
    %62 = arith.mulf %61, %4 : vector<2x256xf32>
    %63 = arith.addf %60, %62 : vector<2x256xf32>
    %c47_i32 = arith.constant 47 : i32
    %64 = tpu.dynamic_rotate %63 by %c47_i32 dim 1 : vector<2x256xf32>, i32 -> vector<2x256xf32>
    %c4_17 = arith.constant 4 : index
    %c0_18 = arith.constant 0 : index
    %65 = vector.load %arg3[%c4_17, %c0_18] : memref<49x256xf32, #tpu.memory_space<vmem>>, vector<1x256xf32>
    %66 = vector.broadcast %65 : vector<1x256xf32> to vector<2x256xf32>
    %67 = arith.mulf %66, %64 : vector<2x256xf32>
    %68 = arith.addf %20, %67 : vector<2x256xf32>
    %c5 = arith.constant 5 : index
    %69 = memref.load %arg2[%c5] : memref<98xf32, #tpu.memory_space<smem>>
    %c54 = arith.constant 54 : index
    %70 = memref.load %arg2[%c54] : memref<98xf32, #tpu.memory_space<smem>>
    %71 = vector.broadcast %69 : f32 to vector<2x256xf32>
    %72 = arith.mulf %71, %3 : vector<2x256xf32>
    %73 = vector.broadcast %70 : f32 to vector<2x256xf32>
    %74 = arith.mulf %73, %4 : vector<2x256xf32>
    %75 = arith.addf %72, %74 : vector<2x256xf32>
    %c46_i32 = arith.constant 46 : i32
    %76 = tpu.dynamic_rotate %75 by %c46_i32 dim 1 : vector<2x256xf32>, i32 -> vector<2x256xf32>
    %c5_19 = arith.constant 5 : index
    %c0_20 = arith.constant 0 : index
    %77 = vector.load %arg3[%c5_19, %c0_20] : memref<49x256xf32, #tpu.memory_space<vmem>>, vector<1x256xf32>
    %78 = vector.broadcast %77 : vector<1x256xf32> to vector<2x256xf32>
    %79 = arith.mulf %78, %76 : vector<2x256xf32>
    %80 = arith.addf %32, %79 : vector<2x256xf32>
    %c6 = arith.constant 6 : index
    %81 = memref.load %arg2[%c6] : memref<98xf32, #tpu.memory_space<smem>>
    %c55 = arith.constant 55 : index
    %82 = memref.load %arg2[%c55] : memref<98xf32, #tpu.memory_space<smem>>
    %83 = vector.broadcast %81 : f32 to vector<2x256xf32>
    %84 = arith.mulf %83, %3 : vector<2x256xf32>
    %85 = vector.broadcast %82 : f32 to vector<2x256xf32>
    %86 = arith.mulf %85, %4 : vector<2x256xf32>
    %87 = arith.addf %84, %86 : vector<2x256xf32>
    %c45_i32 = arith.constant 45 : i32
    %88 = tpu.dynamic_rotate %87 by %c45_i32 dim 1 : vector<2x256xf32>, i32 -> vector<2x256xf32>
    %c6_21 = arith.constant 6 : index
    %c0_22 = arith.constant 0 : index
    %89 = vector.load %arg3[%c6_21, %c0_22] : memref<49x256xf32, #tpu.memory_space<vmem>>, vector<1x256xf32>
    %90 = vector.broadcast %89 : vector<1x256xf32> to vector<2x256xf32>
    %91 = arith.mulf %90, %88 : vector<2x256xf32>
    %92 = arith.addf %44, %91 : vector<2x256xf32>
    %c7 = arith.constant 7 : index
    %93 = memref.load %arg2[%c7] : memref<98xf32, #tpu.memory_space<smem>>
    %c56 = arith.constant 56 : index
    %94 = memref.load %arg2[%c56] : memref<98xf32, #tpu.memory_space<smem>>
    %95 = vector.broadcast %93 : f32 to vector<2x256xf32>
    %96 = arith.mulf %95, %3 : vector<2x256xf32>
    %97 = vector.broadcast %94 : f32 to vector<2x256xf32>
    %98 = arith.mulf %97, %4 : vector<2x256xf32>
    %99 = arith.addf %96, %98 : vector<2x256xf32>
    %c35_i32 = arith.constant 35 : i32
    %100 = tpu.dynamic_rotate %99 by %c35_i32 dim 1 : vector<2x256xf32>, i32 -> vector<2x256xf32>
    %c7_23 = arith.constant 7 : index
    %c0_24 = arith.constant 0 : index
    %101 = vector.load %arg3[%c7_23, %c0_24] : memref<49x256xf32, #tpu.memory_space<vmem>>, vector<1x256xf32>
    %102 = vector.broadcast %101 : vector<1x256xf32> to vector<2x256xf32>
    %103 = arith.mulf %102, %100 : vector<2x256xf32>
    %104 = arith.addf %56, %103 : vector<2x256xf32>
    %c8 = arith.constant 8 : index
    %105 = memref.load %arg2[%c8] : memref<98xf32, #tpu.memory_space<smem>>
    %c57 = arith.constant 57 : index
    %106 = memref.load %arg2[%c57] : memref<98xf32, #tpu.memory_space<smem>>
    %107 = vector.broadcast %105 : f32 to vector<2x256xf32>
    %108 = arith.mulf %107, %3 : vector<2x256xf32>
    %109 = vector.broadcast %106 : f32 to vector<2x256xf32>
    %110 = arith.mulf %109, %4 : vector<2x256xf32>
    %111 = arith.addf %108, %110 : vector<2x256xf32>
    %c34_i32 = arith.constant 34 : i32
    %112 = tpu.dynamic_rotate %111 by %c34_i32 dim 1 : vector<2x256xf32>, i32 -> vector<2x256xf32>
    %c8_25 = arith.constant 8 : index
    %c0_26 = arith.constant 0 : index
    %113 = vector.load %arg3[%c8_25, %c0_26] : memref<49x256xf32, #tpu.memory_space<vmem>>, vector<1x256xf32>
    %114 = vector.broadcast %113 : vector<1x256xf32> to vector<2x256xf32>
    %115 = arith.mulf %114, %112 : vector<2x256xf32>
    %116 = arith.addf %68, %115 : vector<2x256xf32>
    %c9 = arith.constant 9 : index
    %117 = memref.load %arg2[%c9] : memref<98xf32, #tpu.memory_space<smem>>
    %c58 = arith.constant 58 : index
    %118 = memref.load %arg2[%c58] : memref<98xf32, #tpu.memory_space<smem>>
    %119 = vector.broadcast %117 : f32 to vector<2x256xf32>
    %120 = arith.mulf %119, %3 : vector<2x256xf32>
    %121 = vector.broadcast %118 : f32 to vector<2x256xf32>
    %122 = arith.mulf %121, %4 : vector<2x256xf32>
    %123 = arith.addf %120, %122 : vector<2x256xf32>
    %c33_i32 = arith.constant 33 : i32
    %124 = tpu.dynamic_rotate %123 by %c33_i32 dim 1 : vector<2x256xf32>, i32 -> vector<2x256xf32>
    %c9_27 = arith.constant 9 : index
    %c0_28 = arith.constant 0 : index
    %125 = vector.load %arg3[%c9_27, %c0_28] : memref<49x256xf32, #tpu.memory_space<vmem>>, vector<1x256xf32>
    %126 = vector.broadcast %125 : vector<1x256xf32> to vector<2x256xf32>
    %127 = arith.mulf %126, %124 : vector<2x256xf32>
    %128 = arith.addf %80, %127 : vector<2x256xf32>
    %c10 = arith.constant 10 : index
    %129 = memref.load %arg2[%c10] : memref<98xf32, #tpu.memory_space<smem>>
    %c59 = arith.constant 59 : index
    %130 = memref.load %arg2[%c59] : memref<98xf32, #tpu.memory_space<smem>>
    %131 = vector.broadcast %129 : f32 to vector<2x256xf32>
    %132 = arith.mulf %131, %3 : vector<2x256xf32>
    %133 = vector.broadcast %130 : f32 to vector<2x256xf32>
    %134 = arith.mulf %133, %4 : vector<2x256xf32>
    %135 = arith.addf %132, %134 : vector<2x256xf32>
    %c32_i32 = arith.constant 32 : i32
    %136 = tpu.dynamic_rotate %135 by %c32_i32 dim 1 : vector<2x256xf32>, i32 -> vector<2x256xf32>
    %c10_29 = arith.constant 10 : index
    %c0_30 = arith.constant 0 : index
    %137 = vector.load %arg3[%c10_29, %c0_30] : memref<49x256xf32, #tpu.memory_space<vmem>>, vector<1x256xf32>
    %138 = vector.broadcast %137 : vector<1x256xf32> to vector<2x256xf32>
    %139 = arith.mulf %138, %136 : vector<2x256xf32>
    %140 = arith.addf %92, %139 : vector<2x256xf32>
    %c11 = arith.constant 11 : index
    %141 = memref.load %arg2[%c11] : memref<98xf32, #tpu.memory_space<smem>>
    %c60 = arith.constant 60 : index
    %142 = memref.load %arg2[%c60] : memref<98xf32, #tpu.memory_space<smem>>
    %143 = vector.broadcast %141 : f32 to vector<2x256xf32>
    %144 = arith.mulf %143, %3 : vector<2x256xf32>
    %145 = vector.broadcast %142 : f32 to vector<2x256xf32>
    %146 = arith.mulf %145, %4 : vector<2x256xf32>
    %147 = arith.addf %144, %146 : vector<2x256xf32>
    %c31_i32 = arith.constant 31 : i32
    %148 = tpu.dynamic_rotate %147 by %c31_i32 dim 1 : vector<2x256xf32>, i32 -> vector<2x256xf32>
    %c11_31 = arith.constant 11 : index
    %c0_32 = arith.constant 0 : index
    %149 = vector.load %arg3[%c11_31, %c0_32] : memref<49x256xf32, #tpu.memory_space<vmem>>, vector<1x256xf32>
    %150 = vector.broadcast %149 : vector<1x256xf32> to vector<2x256xf32>
    %151 = arith.mulf %150, %148 : vector<2x256xf32>
    %152 = arith.addf %104, %151 : vector<2x256xf32>
    %c12 = arith.constant 12 : index
    %153 = memref.load %arg2[%c12] : memref<98xf32, #tpu.memory_space<smem>>
    %c61 = arith.constant 61 : index
    %154 = memref.load %arg2[%c61] : memref<98xf32, #tpu.memory_space<smem>>
    %155 = vector.broadcast %153 : f32 to vector<2x256xf32>
    %156 = arith.mulf %155, %3 : vector<2x256xf32>
    %157 = vector.broadcast %154 : f32 to vector<2x256xf32>
    %158 = arith.mulf %157, %4 : vector<2x256xf32>
    %159 = arith.addf %156, %158 : vector<2x256xf32>
    %c30_i32 = arith.constant 30 : i32
    %160 = tpu.dynamic_rotate %159 by %c30_i32 dim 1 : vector<2x256xf32>, i32 -> vector<2x256xf32>
    %c12_33 = arith.constant 12 : index
    %c0_34 = arith.constant 0 : index
    %161 = vector.load %arg3[%c12_33, %c0_34] : memref<49x256xf32, #tpu.memory_space<vmem>>, vector<1x256xf32>
    %162 = vector.broadcast %161 : vector<1x256xf32> to vector<2x256xf32>
    %163 = arith.mulf %162, %160 : vector<2x256xf32>
    %164 = arith.addf %116, %163 : vector<2x256xf32>
    %c13 = arith.constant 13 : index
    %165 = memref.load %arg2[%c13] : memref<98xf32, #tpu.memory_space<smem>>
    %c62 = arith.constant 62 : index
    %166 = memref.load %arg2[%c62] : memref<98xf32, #tpu.memory_space<smem>>
    %167 = vector.broadcast %165 : f32 to vector<2x256xf32>
    %168 = arith.mulf %167, %3 : vector<2x256xf32>
    %169 = vector.broadcast %166 : f32 to vector<2x256xf32>
    %170 = arith.mulf %169, %4 : vector<2x256xf32>
    %171 = arith.addf %168, %170 : vector<2x256xf32>
    %c29_i32 = arith.constant 29 : i32
    %172 = tpu.dynamic_rotate %171 by %c29_i32 dim 1 : vector<2x256xf32>, i32 -> vector<2x256xf32>
    %c13_35 = arith.constant 13 : index
    %c0_36 = arith.constant 0 : index
    %173 = vector.load %arg3[%c13_35, %c0_36] : memref<49x256xf32, #tpu.memory_space<vmem>>, vector<1x256xf32>
    %174 = vector.broadcast %173 : vector<1x256xf32> to vector<2x256xf32>
    %175 = arith.mulf %174, %172 : vector<2x256xf32>
    %176 = arith.addf %128, %175 : vector<2x256xf32>
    %c14 = arith.constant 14 : index
    %177 = memref.load %arg2[%c14] : memref<98xf32, #tpu.memory_space<smem>>
    %c63 = arith.constant 63 : index
    %178 = memref.load %arg2[%c63] : memref<98xf32, #tpu.memory_space<smem>>
    %179 = vector.broadcast %177 : f32 to vector<2x256xf32>
    %180 = arith.mulf %179, %3 : vector<2x256xf32>
    %181 = vector.broadcast %178 : f32 to vector<2x256xf32>
    %182 = arith.mulf %181, %4 : vector<2x256xf32>
    %183 = arith.addf %180, %182 : vector<2x256xf32>
    %c19_i32 = arith.constant 19 : i32
    %184 = tpu.dynamic_rotate %183 by %c19_i32 dim 1 : vector<2x256xf32>, i32 -> vector<2x256xf32>
    %c14_37 = arith.constant 14 : index
    %c0_38 = arith.constant 0 : index
    %185 = vector.load %arg3[%c14_37, %c0_38] : memref<49x256xf32, #tpu.memory_space<vmem>>, vector<1x256xf32>
    %186 = vector.broadcast %185 : vector<1x256xf32> to vector<2x256xf32>
    %187 = arith.mulf %186, %184 : vector<2x256xf32>
    %188 = arith.addf %140, %187 : vector<2x256xf32>
    %c15 = arith.constant 15 : index
    %189 = memref.load %arg2[%c15] : memref<98xf32, #tpu.memory_space<smem>>
    %c64 = arith.constant 64 : index
    %190 = memref.load %arg2[%c64] : memref<98xf32, #tpu.memory_space<smem>>
    %191 = vector.broadcast %189 : f32 to vector<2x256xf32>
    %192 = arith.mulf %191, %3 : vector<2x256xf32>
    %193 = vector.broadcast %190 : f32 to vector<2x256xf32>
    %194 = arith.mulf %193, %4 : vector<2x256xf32>
    %195 = arith.addf %192, %194 : vector<2x256xf32>
    %c18_i32 = arith.constant 18 : i32
    %196 = tpu.dynamic_rotate %195 by %c18_i32 dim 1 : vector<2x256xf32>, i32 -> vector<2x256xf32>
    %c15_39 = arith.constant 15 : index
    %c0_40 = arith.constant 0 : index
    %197 = vector.load %arg3[%c15_39, %c0_40] : memref<49x256xf32, #tpu.memory_space<vmem>>, vector<1x256xf32>
    %198 = vector.broadcast %197 : vector<1x256xf32> to vector<2x256xf32>
    %199 = arith.mulf %198, %196 : vector<2x256xf32>
    %200 = arith.addf %152, %199 : vector<2x256xf32>
    %c16 = arith.constant 16 : index
    %201 = memref.load %arg2[%c16] : memref<98xf32, #tpu.memory_space<smem>>
    %c65 = arith.constant 65 : index
    %202 = memref.load %arg2[%c65] : memref<98xf32, #tpu.memory_space<smem>>
    %203 = vector.broadcast %201 : f32 to vector<2x256xf32>
    %204 = arith.mulf %203, %3 : vector<2x256xf32>
    %205 = vector.broadcast %202 : f32 to vector<2x256xf32>
    %206 = arith.mulf %205, %4 : vector<2x256xf32>
    %207 = arith.addf %204, %206 : vector<2x256xf32>
    %c17_i32 = arith.constant 17 : i32
    %208 = tpu.dynamic_rotate %207 by %c17_i32 dim 1 : vector<2x256xf32>, i32 -> vector<2x256xf32>
    %c16_41 = arith.constant 16 : index
    %c0_42 = arith.constant 0 : index
    %209 = vector.load %arg3[%c16_41, %c0_42] : memref<49x256xf32, #tpu.memory_space<vmem>>, vector<1x256xf32>
    %210 = vector.broadcast %209 : vector<1x256xf32> to vector<2x256xf32>
    %211 = arith.mulf %210, %208 : vector<2x256xf32>
    %212 = arith.addf %164, %211 : vector<2x256xf32>
    %c17 = arith.constant 17 : index
    %213 = memref.load %arg2[%c17] : memref<98xf32, #tpu.memory_space<smem>>
    %c66 = arith.constant 66 : index
    %214 = memref.load %arg2[%c66] : memref<98xf32, #tpu.memory_space<smem>>
    %215 = vector.broadcast %213 : f32 to vector<2x256xf32>
    %216 = arith.mulf %215, %3 : vector<2x256xf32>
    %217 = vector.broadcast %214 : f32 to vector<2x256xf32>
    %218 = arith.mulf %217, %4 : vector<2x256xf32>
    %219 = arith.addf %216, %218 : vector<2x256xf32>
    %c16_i32 = arith.constant 16 : i32
    %220 = tpu.dynamic_rotate %219 by %c16_i32 dim 1 : vector<2x256xf32>, i32 -> vector<2x256xf32>
    %c17_43 = arith.constant 17 : index
    %c0_44 = arith.constant 0 : index
    %221 = vector.load %arg3[%c17_43, %c0_44] : memref<49x256xf32, #tpu.memory_space<vmem>>, vector<1x256xf32>
    %222 = vector.broadcast %221 : vector<1x256xf32> to vector<2x256xf32>
    %223 = arith.mulf %222, %220 : vector<2x256xf32>
    %224 = arith.addf %176, %223 : vector<2x256xf32>
    %c18 = arith.constant 18 : index
    %225 = memref.load %arg2[%c18] : memref<98xf32, #tpu.memory_space<smem>>
    %c67 = arith.constant 67 : index
    %226 = memref.load %arg2[%c67] : memref<98xf32, #tpu.memory_space<smem>>
    %227 = vector.broadcast %225 : f32 to vector<2x256xf32>
    %228 = arith.mulf %227, %3 : vector<2x256xf32>
    %229 = vector.broadcast %226 : f32 to vector<2x256xf32>
    %230 = arith.mulf %229, %4 : vector<2x256xf32>
    %231 = arith.addf %228, %230 : vector<2x256xf32>
    %c15_i32 = arith.constant 15 : i32
    %232 = tpu.dynamic_rotate %231 by %c15_i32 dim 1 : vector<2x256xf32>, i32 -> vector<2x256xf32>
    %c18_45 = arith.constant 18 : index
    %c0_46 = arith.constant 0 : index
    %233 = vector.load %arg3[%c18_45, %c0_46] : memref<49x256xf32, #tpu.memory_space<vmem>>, vector<1x256xf32>
    %234 = vector.broadcast %233 : vector<1x256xf32> to vector<2x256xf32>
    %235 = arith.mulf %234, %232 : vector<2x256xf32>
    %236 = arith.addf %188, %235 : vector<2x256xf32>
    %c19 = arith.constant 19 : index
    %237 = memref.load %arg2[%c19] : memref<98xf32, #tpu.memory_space<smem>>
    %c68 = arith.constant 68 : index
    %238 = memref.load %arg2[%c68] : memref<98xf32, #tpu.memory_space<smem>>
    %239 = vector.broadcast %237 : f32 to vector<2x256xf32>
    %240 = arith.mulf %239, %3 : vector<2x256xf32>
    %241 = vector.broadcast %238 : f32 to vector<2x256xf32>
    %242 = arith.mulf %241, %4 : vector<2x256xf32>
    %243 = arith.addf %240, %242 : vector<2x256xf32>
    %c14_i32 = arith.constant 14 : i32
    %244 = tpu.dynamic_rotate %243 by %c14_i32 dim 1 : vector<2x256xf32>, i32 -> vector<2x256xf32>
    %c19_47 = arith.constant 19 : index
    %c0_48 = arith.constant 0 : index
    %245 = vector.load %arg3[%c19_47, %c0_48] : memref<49x256xf32, #tpu.memory_space<vmem>>, vector<1x256xf32>
    %246 = vector.broadcast %245 : vector<1x256xf32> to vector<2x256xf32>
    %247 = arith.mulf %246, %244 : vector<2x256xf32>
    %248 = arith.addf %200, %247 : vector<2x256xf32>
    %c20 = arith.constant 20 : index
    %249 = memref.load %arg2[%c20] : memref<98xf32, #tpu.memory_space<smem>>
    %c69 = arith.constant 69 : index
    %250 = memref.load %arg2[%c69] : memref<98xf32, #tpu.memory_space<smem>>
    %251 = vector.broadcast %249 : f32 to vector<2x256xf32>
    %252 = arith.mulf %251, %3 : vector<2x256xf32>
    %253 = vector.broadcast %250 : f32 to vector<2x256xf32>
    %254 = arith.mulf %253, %4 : vector<2x256xf32>
    %255 = arith.addf %252, %254 : vector<2x256xf32>
    %c13_i32 = arith.constant 13 : i32
    %256 = tpu.dynamic_rotate %255 by %c13_i32 dim 1 : vector<2x256xf32>, i32 -> vector<2x256xf32>
    %c20_49 = arith.constant 20 : index
    %c0_50 = arith.constant 0 : index
    %257 = vector.load %arg3[%c20_49, %c0_50] : memref<49x256xf32, #tpu.memory_space<vmem>>, vector<1x256xf32>
    %258 = vector.broadcast %257 : vector<1x256xf32> to vector<2x256xf32>
    %259 = arith.mulf %258, %256 : vector<2x256xf32>
    %260 = arith.addf %212, %259 : vector<2x256xf32>
    %c21 = arith.constant 21 : index
    %261 = memref.load %arg2[%c21] : memref<98xf32, #tpu.memory_space<smem>>
    %c70 = arith.constant 70 : index
    %262 = memref.load %arg2[%c70] : memref<98xf32, #tpu.memory_space<smem>>
    %263 = vector.broadcast %261 : f32 to vector<2x256xf32>
    %264 = arith.mulf %263, %3 : vector<2x256xf32>
    %265 = vector.broadcast %262 : f32 to vector<2x256xf32>
    %266 = arith.mulf %265, %4 : vector<2x256xf32>
    %267 = arith.addf %264, %266 : vector<2x256xf32>
    %c3_i32 = arith.constant 3 : i32
    %268 = tpu.dynamic_rotate %267 by %c3_i32 dim 1 : vector<2x256xf32>, i32 -> vector<2x256xf32>
    %c21_51 = arith.constant 21 : index
    %c0_52 = arith.constant 0 : index
    %269 = vector.load %arg3[%c21_51, %c0_52] : memref<49x256xf32, #tpu.memory_space<vmem>>, vector<1x256xf32>
    %270 = vector.broadcast %269 : vector<1x256xf32> to vector<2x256xf32>
    %271 = arith.mulf %270, %268 : vector<2x256xf32>
    %272 = arith.addf %224, %271 : vector<2x256xf32>
    %c22 = arith.constant 22 : index
    %273 = memref.load %arg2[%c22] : memref<98xf32, #tpu.memory_space<smem>>
    %c71 = arith.constant 71 : index
    %274 = memref.load %arg2[%c71] : memref<98xf32, #tpu.memory_space<smem>>
    %275 = vector.broadcast %273 : f32 to vector<2x256xf32>
    %276 = arith.mulf %275, %3 : vector<2x256xf32>
    %277 = vector.broadcast %274 : f32 to vector<2x256xf32>
    %278 = arith.mulf %277, %4 : vector<2x256xf32>
    %279 = arith.addf %276, %278 : vector<2x256xf32>
    %c2_i32 = arith.constant 2 : i32
    %280 = tpu.dynamic_rotate %279 by %c2_i32 dim 1 : vector<2x256xf32>, i32 -> vector<2x256xf32>
    %c22_53 = arith.constant 22 : index
    %c0_54 = arith.constant 0 : index
    %281 = vector.load %arg3[%c22_53, %c0_54] : memref<49x256xf32, #tpu.memory_space<vmem>>, vector<1x256xf32>
    %282 = vector.broadcast %281 : vector<1x256xf32> to vector<2x256xf32>
    %283 = arith.mulf %282, %280 : vector<2x256xf32>
    %284 = arith.addf %236, %283 : vector<2x256xf32>
    %c23 = arith.constant 23 : index
    %285 = memref.load %arg2[%c23] : memref<98xf32, #tpu.memory_space<smem>>
    %c72 = arith.constant 72 : index
    %286 = memref.load %arg2[%c72] : memref<98xf32, #tpu.memory_space<smem>>
    %287 = vector.broadcast %285 : f32 to vector<2x256xf32>
    %288 = arith.mulf %287, %3 : vector<2x256xf32>
    %289 = vector.broadcast %286 : f32 to vector<2x256xf32>
    %290 = arith.mulf %289, %4 : vector<2x256xf32>
    %291 = arith.addf %288, %290 : vector<2x256xf32>
    %c1_i32 = arith.constant 1 : i32
    %292 = tpu.dynamic_rotate %291 by %c1_i32 dim 1 : vector<2x256xf32>, i32 -> vector<2x256xf32>
    %c23_55 = arith.constant 23 : index
    %c0_56 = arith.constant 0 : index
    %293 = vector.load %arg3[%c23_55, %c0_56] : memref<49x256xf32, #tpu.memory_space<vmem>>, vector<1x256xf32>
    %294 = vector.broadcast %293 : vector<1x256xf32> to vector<2x256xf32>
    %295 = arith.mulf %294, %292 : vector<2x256xf32>
    %296 = arith.addf %248, %295 : vector<2x256xf32>
    %c24 = arith.constant 24 : index
    %297 = memref.load %arg2[%c24] : memref<98xf32, #tpu.memory_space<smem>>
    %c73 = arith.constant 73 : index
    %298 = memref.load %arg2[%c73] : memref<98xf32, #tpu.memory_space<smem>>
    %299 = vector.broadcast %297 : f32 to vector<2x256xf32>
    %300 = arith.mulf %299, %3 : vector<2x256xf32>
    %301 = vector.broadcast %298 : f32 to vector<2x256xf32>
    %302 = arith.mulf %301, %4 : vector<2x256xf32>
    %303 = arith.addf %300, %302 : vector<2x256xf32>
    %c24_57 = arith.constant 24 : index
    %c0_58 = arith.constant 0 : index
    %304 = vector.load %arg3[%c24_57, %c0_58] : memref<49x256xf32, #tpu.memory_space<vmem>>, vector<1x256xf32>
    %305 = vector.broadcast %304 : vector<1x256xf32> to vector<2x256xf32>
    %306 = arith.mulf %305, %303 : vector<2x256xf32>
    %307 = arith.addf %260, %306 : vector<2x256xf32>
    %c25 = arith.constant 25 : index
    %308 = memref.load %arg2[%c25] : memref<98xf32, #tpu.memory_space<smem>>
    %c74 = arith.constant 74 : index
    %309 = memref.load %arg2[%c74] : memref<98xf32, #tpu.memory_space<smem>>
    %310 = vector.broadcast %308 : f32 to vector<2x256xf32>
    %311 = arith.mulf %310, %3 : vector<2x256xf32>
    %312 = vector.broadcast %309 : f32 to vector<2x256xf32>
    %313 = arith.mulf %312, %4 : vector<2x256xf32>
    %314 = arith.addf %311, %313 : vector<2x256xf32>
    %c255_i32 = arith.constant 255 : i32
    %315 = tpu.dynamic_rotate %314 by %c255_i32 dim 1 : vector<2x256xf32>, i32 -> vector<2x256xf32>
    %c25_59 = arith.constant 25 : index
    %c0_60 = arith.constant 0 : index
    %316 = vector.load %arg3[%c25_59, %c0_60] : memref<49x256xf32, #tpu.memory_space<vmem>>, vector<1x256xf32>
    %317 = vector.broadcast %316 : vector<1x256xf32> to vector<2x256xf32>
    %318 = arith.mulf %317, %315 : vector<2x256xf32>
    %319 = arith.addf %272, %318 : vector<2x256xf32>
    %c26 = arith.constant 26 : index
    %320 = memref.load %arg2[%c26] : memref<98xf32, #tpu.memory_space<smem>>
    %c75 = arith.constant 75 : index
    %321 = memref.load %arg2[%c75] : memref<98xf32, #tpu.memory_space<smem>>
    %322 = vector.broadcast %320 : f32 to vector<2x256xf32>
    %323 = arith.mulf %322, %3 : vector<2x256xf32>
    %324 = vector.broadcast %321 : f32 to vector<2x256xf32>
    %325 = arith.mulf %324, %4 : vector<2x256xf32>
    %326 = arith.addf %323, %325 : vector<2x256xf32>
    %c254_i32 = arith.constant 254 : i32
    %327 = tpu.dynamic_rotate %326 by %c254_i32 dim 1 : vector<2x256xf32>, i32 -> vector<2x256xf32>
    %c26_61 = arith.constant 26 : index
    %c0_62 = arith.constant 0 : index
    %328 = vector.load %arg3[%c26_61, %c0_62] : memref<49x256xf32, #tpu.memory_space<vmem>>, vector<1x256xf32>
    %329 = vector.broadcast %328 : vector<1x256xf32> to vector<2x256xf32>
    %330 = arith.mulf %329, %327 : vector<2x256xf32>
    %331 = arith.addf %284, %330 : vector<2x256xf32>
    %c27 = arith.constant 27 : index
    %332 = memref.load %arg2[%c27] : memref<98xf32, #tpu.memory_space<smem>>
    %c76 = arith.constant 76 : index
    %333 = memref.load %arg2[%c76] : memref<98xf32, #tpu.memory_space<smem>>
    %334 = vector.broadcast %332 : f32 to vector<2x256xf32>
    %335 = arith.mulf %334, %3 : vector<2x256xf32>
    %336 = vector.broadcast %333 : f32 to vector<2x256xf32>
    %337 = arith.mulf %336, %4 : vector<2x256xf32>
    %338 = arith.addf %335, %337 : vector<2x256xf32>
    %c253_i32 = arith.constant 253 : i32
    %339 = tpu.dynamic_rotate %338 by %c253_i32 dim 1 : vector<2x256xf32>, i32 -> vector<2x256xf32>
    %c27_63 = arith.constant 27 : index
    %c0_64 = arith.constant 0 : index
    %340 = vector.load %arg3[%c27_63, %c0_64] : memref<49x256xf32, #tpu.memory_space<vmem>>, vector<1x256xf32>
    %341 = vector.broadcast %340 : vector<1x256xf32> to vector<2x256xf32>
    %342 = arith.mulf %341, %339 : vector<2x256xf32>
    %343 = arith.addf %296, %342 : vector<2x256xf32>
    %c28 = arith.constant 28 : index
    %344 = memref.load %arg2[%c28] : memref<98xf32, #tpu.memory_space<smem>>
    %c77 = arith.constant 77 : index
    %345 = memref.load %arg2[%c77] : memref<98xf32, #tpu.memory_space<smem>>
    %346 = vector.broadcast %344 : f32 to vector<2x256xf32>
    %347 = arith.mulf %346, %3 : vector<2x256xf32>
    %348 = vector.broadcast %345 : f32 to vector<2x256xf32>
    %349 = arith.mulf %348, %4 : vector<2x256xf32>
    %350 = arith.addf %347, %349 : vector<2x256xf32>
    %c243_i32 = arith.constant 243 : i32
    %351 = tpu.dynamic_rotate %350 by %c243_i32 dim 1 : vector<2x256xf32>, i32 -> vector<2x256xf32>
    %c28_65 = arith.constant 28 : index
    %c0_66 = arith.constant 0 : index
    %352 = vector.load %arg3[%c28_65, %c0_66] : memref<49x256xf32, #tpu.memory_space<vmem>>, vector<1x256xf32>
    %353 = vector.broadcast %352 : vector<1x256xf32> to vector<2x256xf32>
    %354 = arith.mulf %353, %351 : vector<2x256xf32>
    %355 = arith.addf %307, %354 : vector<2x256xf32>
    %c29 = arith.constant 29 : index
    %356 = memref.load %arg2[%c29] : memref<98xf32, #tpu.memory_space<smem>>
    %c78 = arith.constant 78 : index
    %357 = memref.load %arg2[%c78] : memref<98xf32, #tpu.memory_space<smem>>
    %358 = vector.broadcast %356 : f32 to vector<2x256xf32>
    %359 = arith.mulf %358, %3 : vector<2x256xf32>
    %360 = vector.broadcast %357 : f32 to vector<2x256xf32>
    %361 = arith.mulf %360, %4 : vector<2x256xf32>
    %362 = arith.addf %359, %361 : vector<2x256xf32>
    %c242_i32 = arith.constant 242 : i32
    %363 = tpu.dynamic_rotate %362 by %c242_i32 dim 1 : vector<2x256xf32>, i32 -> vector<2x256xf32>
    %c29_67 = arith.constant 29 : index
    %c0_68 = arith.constant 0 : index
    %364 = vector.load %arg3[%c29_67, %c0_68] : memref<49x256xf32, #tpu.memory_space<vmem>>, vector<1x256xf32>
    %365 = vector.broadcast %364 : vector<1x256xf32> to vector<2x256xf32>
    %366 = arith.mulf %365, %363 : vector<2x256xf32>
    %367 = arith.addf %319, %366 : vector<2x256xf32>
    %c30 = arith.constant 30 : index
    %368 = memref.load %arg2[%c30] : memref<98xf32, #tpu.memory_space<smem>>
    %c79 = arith.constant 79 : index
    %369 = memref.load %arg2[%c79] : memref<98xf32, #tpu.memory_space<smem>>
    %370 = vector.broadcast %368 : f32 to vector<2x256xf32>
    %371 = arith.mulf %370, %3 : vector<2x256xf32>
    %372 = vector.broadcast %369 : f32 to vector<2x256xf32>
    %373 = arith.mulf %372, %4 : vector<2x256xf32>
    %374 = arith.addf %371, %373 : vector<2x256xf32>
    %c241_i32 = arith.constant 241 : i32
    %375 = tpu.dynamic_rotate %374 by %c241_i32 dim 1 : vector<2x256xf32>, i32 -> vector<2x256xf32>
    %c30_69 = arith.constant 30 : index
    %c0_70 = arith.constant 0 : index
    %376 = vector.load %arg3[%c30_69, %c0_70] : memref<49x256xf32, #tpu.memory_space<vmem>>, vector<1x256xf32>
    %377 = vector.broadcast %376 : vector<1x256xf32> to vector<2x256xf32>
    %378 = arith.mulf %377, %375 : vector<2x256xf32>
    %379 = arith.addf %331, %378 : vector<2x256xf32>
    %c31 = arith.constant 31 : index
    %380 = memref.load %arg2[%c31] : memref<98xf32, #tpu.memory_space<smem>>
    %c80 = arith.constant 80 : index
    %381 = memref.load %arg2[%c80] : memref<98xf32, #tpu.memory_space<smem>>
    %382 = vector.broadcast %380 : f32 to vector<2x256xf32>
    %383 = arith.mulf %382, %3 : vector<2x256xf32>
    %384 = vector.broadcast %381 : f32 to vector<2x256xf32>
    %385 = arith.mulf %384, %4 : vector<2x256xf32>
    %386 = arith.addf %383, %385 : vector<2x256xf32>
    %c240_i32 = arith.constant 240 : i32
    %387 = tpu.dynamic_rotate %386 by %c240_i32 dim 1 : vector<2x256xf32>, i32 -> vector<2x256xf32>
    %c31_71 = arith.constant 31 : index
    %c0_72 = arith.constant 0 : index
    %388 = vector.load %arg3[%c31_71, %c0_72] : memref<49x256xf32, #tpu.memory_space<vmem>>, vector<1x256xf32>
    %389 = vector.broadcast %388 : vector<1x256xf32> to vector<2x256xf32>
    %390 = arith.mulf %389, %387 : vector<2x256xf32>
    %391 = arith.addf %343, %390 : vector<2x256xf32>
    %c32 = arith.constant 32 : index
    %392 = memref.load %arg2[%c32] : memref<98xf32, #tpu.memory_space<smem>>
    %c81 = arith.constant 81 : index
    %393 = memref.load %arg2[%c81] : memref<98xf32, #tpu.memory_space<smem>>
    %394 = vector.broadcast %392 : f32 to vector<2x256xf32>
    %395 = arith.mulf %394, %3 : vector<2x256xf32>
    %396 = vector.broadcast %393 : f32 to vector<2x256xf32>
    %397 = arith.mulf %396, %4 : vector<2x256xf32>
    %398 = arith.addf %395, %397 : vector<2x256xf32>
    %c239_i32 = arith.constant 239 : i32
    %399 = tpu.dynamic_rotate %398 by %c239_i32 dim 1 : vector<2x256xf32>, i32 -> vector<2x256xf32>
    %c32_73 = arith.constant 32 : index
    %c0_74 = arith.constant 0 : index
    %400 = vector.load %arg3[%c32_73, %c0_74] : memref<49x256xf32, #tpu.memory_space<vmem>>, vector<1x256xf32>
    %401 = vector.broadcast %400 : vector<1x256xf32> to vector<2x256xf32>
    %402 = arith.mulf %401, %399 : vector<2x256xf32>
    %403 = arith.addf %355, %402 : vector<2x256xf32>
    %c33 = arith.constant 33 : index
    %404 = memref.load %arg2[%c33] : memref<98xf32, #tpu.memory_space<smem>>
    %c82 = arith.constant 82 : index
    %405 = memref.load %arg2[%c82] : memref<98xf32, #tpu.memory_space<smem>>
    %406 = vector.broadcast %404 : f32 to vector<2x256xf32>
    %407 = arith.mulf %406, %3 : vector<2x256xf32>
    %408 = vector.broadcast %405 : f32 to vector<2x256xf32>
    %409 = arith.mulf %408, %4 : vector<2x256xf32>
    %410 = arith.addf %407, %409 : vector<2x256xf32>
    %c238_i32 = arith.constant 238 : i32
    %411 = tpu.dynamic_rotate %410 by %c238_i32 dim 1 : vector<2x256xf32>, i32 -> vector<2x256xf32>
    %c33_75 = arith.constant 33 : index
    %c0_76 = arith.constant 0 : index
    %412 = vector.load %arg3[%c33_75, %c0_76] : memref<49x256xf32, #tpu.memory_space<vmem>>, vector<1x256xf32>
    %413 = vector.broadcast %412 : vector<1x256xf32> to vector<2x256xf32>
    %414 = arith.mulf %413, %411 : vector<2x256xf32>
    %415 = arith.addf %367, %414 : vector<2x256xf32>
    %c34 = arith.constant 34 : index
    %416 = memref.load %arg2[%c34] : memref<98xf32, #tpu.memory_space<smem>>
    %c83 = arith.constant 83 : index
    %417 = memref.load %arg2[%c83] : memref<98xf32, #tpu.memory_space<smem>>
    %418 = vector.broadcast %416 : f32 to vector<2x256xf32>
    %419 = arith.mulf %418, %3 : vector<2x256xf32>
    %420 = vector.broadcast %417 : f32 to vector<2x256xf32>
    %421 = arith.mulf %420, %4 : vector<2x256xf32>
    %422 = arith.addf %419, %421 : vector<2x256xf32>
    %c237_i32 = arith.constant 237 : i32
    %423 = tpu.dynamic_rotate %422 by %c237_i32 dim 1 : vector<2x256xf32>, i32 -> vector<2x256xf32>
    %c34_77 = arith.constant 34 : index
    %c0_78 = arith.constant 0 : index
    %424 = vector.load %arg3[%c34_77, %c0_78] : memref<49x256xf32, #tpu.memory_space<vmem>>, vector<1x256xf32>
    %425 = vector.broadcast %424 : vector<1x256xf32> to vector<2x256xf32>
    %426 = arith.mulf %425, %423 : vector<2x256xf32>
    %427 = arith.addf %379, %426 : vector<2x256xf32>
    %c35 = arith.constant 35 : index
    %428 = memref.load %arg2[%c35] : memref<98xf32, #tpu.memory_space<smem>>
    %c84 = arith.constant 84 : index
    %429 = memref.load %arg2[%c84] : memref<98xf32, #tpu.memory_space<smem>>
    %430 = vector.broadcast %428 : f32 to vector<2x256xf32>
    %431 = arith.mulf %430, %3 : vector<2x256xf32>
    %432 = vector.broadcast %429 : f32 to vector<2x256xf32>
    %433 = arith.mulf %432, %4 : vector<2x256xf32>
    %434 = arith.addf %431, %433 : vector<2x256xf32>
    %c227_i32 = arith.constant 227 : i32
    %435 = tpu.dynamic_rotate %434 by %c227_i32 dim 1 : vector<2x256xf32>, i32 -> vector<2x256xf32>
    %c35_79 = arith.constant 35 : index
    %c0_80 = arith.constant 0 : index
    %436 = vector.load %arg3[%c35_79, %c0_80] : memref<49x256xf32, #tpu.memory_space<vmem>>, vector<1x256xf32>
    %437 = vector.broadcast %436 : vector<1x256xf32> to vector<2x256xf32>
    %438 = arith.mulf %437, %435 : vector<2x256xf32>
    %439 = arith.addf %391, %438 : vector<2x256xf32>
    %c36 = arith.constant 36 : index
    %440 = memref.load %arg2[%c36] : memref<98xf32, #tpu.memory_space<smem>>
    %c85 = arith.constant 85 : index
    %441 = memref.load %arg2[%c85] : memref<98xf32, #tpu.memory_space<smem>>
    %442 = vector.broadcast %440 : f32 to vector<2x256xf32>
    %443 = arith.mulf %442, %3 : vector<2x256xf32>
    %444 = vector.broadcast %441 : f32 to vector<2x256xf32>
    %445 = arith.mulf %444, %4 : vector<2x256xf32>
    %446 = arith.addf %443, %445 : vector<2x256xf32>
    %c226_i32 = arith.constant 226 : i32
    %447 = tpu.dynamic_rotate %446 by %c226_i32 dim 1 : vector<2x256xf32>, i32 -> vector<2x256xf32>
    %c36_81 = arith.constant 36 : index
    %c0_82 = arith.constant 0 : index
    %448 = vector.load %arg3[%c36_81, %c0_82] : memref<49x256xf32, #tpu.memory_space<vmem>>, vector<1x256xf32>
    %449 = vector.broadcast %448 : vector<1x256xf32> to vector<2x256xf32>
    %450 = arith.mulf %449, %447 : vector<2x256xf32>
    %451 = arith.addf %403, %450 : vector<2x256xf32>
    %c37 = arith.constant 37 : index
    %452 = memref.load %arg2[%c37] : memref<98xf32, #tpu.memory_space<smem>>
    %c86 = arith.constant 86 : index
    %453 = memref.load %arg2[%c86] : memref<98xf32, #tpu.memory_space<smem>>
    %454 = vector.broadcast %452 : f32 to vector<2x256xf32>
    %455 = arith.mulf %454, %3 : vector<2x256xf32>
    %456 = vector.broadcast %453 : f32 to vector<2x256xf32>
    %457 = arith.mulf %456, %4 : vector<2x256xf32>
    %458 = arith.addf %455, %457 : vector<2x256xf32>
    %c225_i32 = arith.constant 225 : i32
    %459 = tpu.dynamic_rotate %458 by %c225_i32 dim 1 : vector<2x256xf32>, i32 -> vector<2x256xf32>
    %c37_83 = arith.constant 37 : index
    %c0_84 = arith.constant 0 : index
    %460 = vector.load %arg3[%c37_83, %c0_84] : memref<49x256xf32, #tpu.memory_space<vmem>>, vector<1x256xf32>
    %461 = vector.broadcast %460 : vector<1x256xf32> to vector<2x256xf32>
    %462 = arith.mulf %461, %459 : vector<2x256xf32>
    %463 = arith.addf %415, %462 : vector<2x256xf32>
    %c38 = arith.constant 38 : index
    %464 = memref.load %arg2[%c38] : memref<98xf32, #tpu.memory_space<smem>>
    %c87 = arith.constant 87 : index
    %465 = memref.load %arg2[%c87] : memref<98xf32, #tpu.memory_space<smem>>
    %466 = vector.broadcast %464 : f32 to vector<2x256xf32>
    %467 = arith.mulf %466, %3 : vector<2x256xf32>
    %468 = vector.broadcast %465 : f32 to vector<2x256xf32>
    %469 = arith.mulf %468, %4 : vector<2x256xf32>
    %470 = arith.addf %467, %469 : vector<2x256xf32>
    %c224_i32 = arith.constant 224 : i32
    %471 = tpu.dynamic_rotate %470 by %c224_i32 dim 1 : vector<2x256xf32>, i32 -> vector<2x256xf32>
    %c38_85 = arith.constant 38 : index
    %c0_86 = arith.constant 0 : index
    %472 = vector.load %arg3[%c38_85, %c0_86] : memref<49x256xf32, #tpu.memory_space<vmem>>, vector<1x256xf32>
    %473 = vector.broadcast %472 : vector<1x256xf32> to vector<2x256xf32>
    %474 = arith.mulf %473, %471 : vector<2x256xf32>
    %475 = arith.addf %427, %474 : vector<2x256xf32>
    %c39 = arith.constant 39 : index
    %476 = memref.load %arg2[%c39] : memref<98xf32, #tpu.memory_space<smem>>
    %c88 = arith.constant 88 : index
    %477 = memref.load %arg2[%c88] : memref<98xf32, #tpu.memory_space<smem>>
    %478 = vector.broadcast %476 : f32 to vector<2x256xf32>
    %479 = arith.mulf %478, %3 : vector<2x256xf32>
    %480 = vector.broadcast %477 : f32 to vector<2x256xf32>
    %481 = arith.mulf %480, %4 : vector<2x256xf32>
    %482 = arith.addf %479, %481 : vector<2x256xf32>
    %c223_i32 = arith.constant 223 : i32
    %483 = tpu.dynamic_rotate %482 by %c223_i32 dim 1 : vector<2x256xf32>, i32 -> vector<2x256xf32>
    %c39_87 = arith.constant 39 : index
    %c0_88 = arith.constant 0 : index
    %484 = vector.load %arg3[%c39_87, %c0_88] : memref<49x256xf32, #tpu.memory_space<vmem>>, vector<1x256xf32>
    %485 = vector.broadcast %484 : vector<1x256xf32> to vector<2x256xf32>
    %486 = arith.mulf %485, %483 : vector<2x256xf32>
    %487 = arith.addf %439, %486 : vector<2x256xf32>
    %c40 = arith.constant 40 : index
    %488 = memref.load %arg2[%c40] : memref<98xf32, #tpu.memory_space<smem>>
    %c89 = arith.constant 89 : index
    %489 = memref.load %arg2[%c89] : memref<98xf32, #tpu.memory_space<smem>>
    %490 = vector.broadcast %488 : f32 to vector<2x256xf32>
    %491 = arith.mulf %490, %3 : vector<2x256xf32>
    %492 = vector.broadcast %489 : f32 to vector<2x256xf32>
    %493 = arith.mulf %492, %4 : vector<2x256xf32>
    %494 = arith.addf %491, %493 : vector<2x256xf32>
    %c222_i32 = arith.constant 222 : i32
    %495 = tpu.dynamic_rotate %494 by %c222_i32 dim 1 : vector<2x256xf32>, i32 -> vector<2x256xf32>
    %c40_89 = arith.constant 40 : index
    %c0_90 = arith.constant 0 : index
    %496 = vector.load %arg3[%c40_89, %c0_90] : memref<49x256xf32, #tpu.memory_space<vmem>>, vector<1x256xf32>
    %497 = vector.broadcast %496 : vector<1x256xf32> to vector<2x256xf32>
    %498 = arith.mulf %497, %495 : vector<2x256xf32>
    %499 = arith.addf %451, %498 : vector<2x256xf32>
    %c41 = arith.constant 41 : index
    %500 = memref.load %arg2[%c41] : memref<98xf32, #tpu.memory_space<smem>>
    %c90 = arith.constant 90 : index
    %501 = memref.load %arg2[%c90] : memref<98xf32, #tpu.memory_space<smem>>
    %502 = vector.broadcast %500 : f32 to vector<2x256xf32>
    %503 = arith.mulf %502, %3 : vector<2x256xf32>
    %504 = vector.broadcast %501 : f32 to vector<2x256xf32>
    %505 = arith.mulf %504, %4 : vector<2x256xf32>
    %506 = arith.addf %503, %505 : vector<2x256xf32>
    %c221_i32 = arith.constant 221 : i32
    %507 = tpu.dynamic_rotate %506 by %c221_i32 dim 1 : vector<2x256xf32>, i32 -> vector<2x256xf32>
    %c41_91 = arith.constant 41 : index
    %c0_92 = arith.constant 0 : index
    %508 = vector.load %arg3[%c41_91, %c0_92] : memref<49x256xf32, #tpu.memory_space<vmem>>, vector<1x256xf32>
    %509 = vector.broadcast %508 : vector<1x256xf32> to vector<2x256xf32>
    %510 = arith.mulf %509, %507 : vector<2x256xf32>
    %511 = arith.addf %463, %510 : vector<2x256xf32>
    %c42 = arith.constant 42 : index
    %512 = memref.load %arg2[%c42] : memref<98xf32, #tpu.memory_space<smem>>
    %c91 = arith.constant 91 : index
    %513 = memref.load %arg2[%c91] : memref<98xf32, #tpu.memory_space<smem>>
    %514 = vector.broadcast %512 : f32 to vector<2x256xf32>
    %515 = arith.mulf %514, %3 : vector<2x256xf32>
    %516 = vector.broadcast %513 : f32 to vector<2x256xf32>
    %517 = arith.mulf %516, %4 : vector<2x256xf32>
    %518 = arith.addf %515, %517 : vector<2x256xf32>
    %c211_i32 = arith.constant 211 : i32
    %519 = tpu.dynamic_rotate %518 by %c211_i32 dim 1 : vector<2x256xf32>, i32 -> vector<2x256xf32>
    %c42_93 = arith.constant 42 : index
    %c0_94 = arith.constant 0 : index
    %520 = vector.load %arg3[%c42_93, %c0_94] : memref<49x256xf32, #tpu.memory_space<vmem>>, vector<1x256xf32>
    %521 = vector.broadcast %520 : vector<1x256xf32> to vector<2x256xf32>
    %522 = arith.mulf %521, %519 : vector<2x256xf32>
    %523 = arith.addf %475, %522 : vector<2x256xf32>
    %c43 = arith.constant 43 : index
    %524 = memref.load %arg2[%c43] : memref<98xf32, #tpu.memory_space<smem>>
    %c92 = arith.constant 92 : index
    %525 = memref.load %arg2[%c92] : memref<98xf32, #tpu.memory_space<smem>>
    %526 = vector.broadcast %524 : f32 to vector<2x256xf32>
    %527 = arith.mulf %526, %3 : vector<2x256xf32>
    %528 = vector.broadcast %525 : f32 to vector<2x256xf32>
    %529 = arith.mulf %528, %4 : vector<2x256xf32>
    %530 = arith.addf %527, %529 : vector<2x256xf32>
    %c210_i32 = arith.constant 210 : i32
    %531 = tpu.dynamic_rotate %530 by %c210_i32 dim 1 : vector<2x256xf32>, i32 -> vector<2x256xf32>
    %c43_95 = arith.constant 43 : index
    %c0_96 = arith.constant 0 : index
    %532 = vector.load %arg3[%c43_95, %c0_96] : memref<49x256xf32, #tpu.memory_space<vmem>>, vector<1x256xf32>
    %533 = vector.broadcast %532 : vector<1x256xf32> to vector<2x256xf32>
    %534 = arith.mulf %533, %531 : vector<2x256xf32>
    %535 = arith.addf %487, %534 : vector<2x256xf32>
    %c44 = arith.constant 44 : index
    %536 = memref.load %arg2[%c44] : memref<98xf32, #tpu.memory_space<smem>>
    %c93 = arith.constant 93 : index
    %537 = memref.load %arg2[%c93] : memref<98xf32, #tpu.memory_space<smem>>
    %538 = vector.broadcast %536 : f32 to vector<2x256xf32>
    %539 = arith.mulf %538, %3 : vector<2x256xf32>
    %540 = vector.broadcast %537 : f32 to vector<2x256xf32>
    %541 = arith.mulf %540, %4 : vector<2x256xf32>
    %542 = arith.addf %539, %541 : vector<2x256xf32>
    %c209_i32 = arith.constant 209 : i32
    %543 = tpu.dynamic_rotate %542 by %c209_i32 dim 1 : vector<2x256xf32>, i32 -> vector<2x256xf32>
    %c44_97 = arith.constant 44 : index
    %c0_98 = arith.constant 0 : index
    %544 = vector.load %arg3[%c44_97, %c0_98] : memref<49x256xf32, #tpu.memory_space<vmem>>, vector<1x256xf32>
    %545 = vector.broadcast %544 : vector<1x256xf32> to vector<2x256xf32>
    %546 = arith.mulf %545, %543 : vector<2x256xf32>
    %547 = arith.addf %499, %546 : vector<2x256xf32>
    %c45 = arith.constant 45 : index
    %548 = memref.load %arg2[%c45] : memref<98xf32, #tpu.memory_space<smem>>
    %c94 = arith.constant 94 : index
    %549 = memref.load %arg2[%c94] : memref<98xf32, #tpu.memory_space<smem>>
    %550 = vector.broadcast %548 : f32 to vector<2x256xf32>
    %551 = arith.mulf %550, %3 : vector<2x256xf32>
    %552 = vector.broadcast %549 : f32 to vector<2x256xf32>
    %553 = arith.mulf %552, %4 : vector<2x256xf32>
    %554 = arith.addf %551, %553 : vector<2x256xf32>
    %c208_i32 = arith.constant 208 : i32
    %555 = tpu.dynamic_rotate %554 by %c208_i32 dim 1 : vector<2x256xf32>, i32 -> vector<2x256xf32>
    %c45_99 = arith.constant 45 : index
    %c0_100 = arith.constant 0 : index
    %556 = vector.load %arg3[%c45_99, %c0_100] : memref<49x256xf32, #tpu.memory_space<vmem>>, vector<1x256xf32>
    %557 = vector.broadcast %556 : vector<1x256xf32> to vector<2x256xf32>
    %558 = arith.mulf %557, %555 : vector<2x256xf32>
    %559 = arith.addf %511, %558 : vector<2x256xf32>
    %c46 = arith.constant 46 : index
    %560 = memref.load %arg2[%c46] : memref<98xf32, #tpu.memory_space<smem>>
    %c95 = arith.constant 95 : index
    %561 = memref.load %arg2[%c95] : memref<98xf32, #tpu.memory_space<smem>>
    %562 = vector.broadcast %560 : f32 to vector<2x256xf32>
    %563 = arith.mulf %562, %3 : vector<2x256xf32>
    %564 = vector.broadcast %561 : f32 to vector<2x256xf32>
    %565 = arith.mulf %564, %4 : vector<2x256xf32>
    %566 = arith.addf %563, %565 : vector<2x256xf32>
    %c207_i32 = arith.constant 207 : i32
    %567 = tpu.dynamic_rotate %566 by %c207_i32 dim 1 : vector<2x256xf32>, i32 -> vector<2x256xf32>
    %c46_101 = arith.constant 46 : index
    %c0_102 = arith.constant 0 : index
    %568 = vector.load %arg3[%c46_101, %c0_102] : memref<49x256xf32, #tpu.memory_space<vmem>>, vector<1x256xf32>
    %569 = vector.broadcast %568 : vector<1x256xf32> to vector<2x256xf32>
    %570 = arith.mulf %569, %567 : vector<2x256xf32>
    %571 = arith.addf %523, %570 : vector<2x256xf32>
    %c47 = arith.constant 47 : index
    %572 = memref.load %arg2[%c47] : memref<98xf32, #tpu.memory_space<smem>>
    %c96 = arith.constant 96 : index
    %573 = memref.load %arg2[%c96] : memref<98xf32, #tpu.memory_space<smem>>
    %574 = vector.broadcast %572 : f32 to vector<2x256xf32>
    %575 = arith.mulf %574, %3 : vector<2x256xf32>
    %576 = vector.broadcast %573 : f32 to vector<2x256xf32>
    %577 = arith.mulf %576, %4 : vector<2x256xf32>
    %578 = arith.addf %575, %577 : vector<2x256xf32>
    %c206_i32 = arith.constant 206 : i32
    %579 = tpu.dynamic_rotate %578 by %c206_i32 dim 1 : vector<2x256xf32>, i32 -> vector<2x256xf32>
    %c47_103 = arith.constant 47 : index
    %c0_104 = arith.constant 0 : index
    %580 = vector.load %arg3[%c47_103, %c0_104] : memref<49x256xf32, #tpu.memory_space<vmem>>, vector<1x256xf32>
    %581 = vector.broadcast %580 : vector<1x256xf32> to vector<2x256xf32>
    %582 = arith.mulf %581, %579 : vector<2x256xf32>
    %583 = arith.addf %535, %582 : vector<2x256xf32>
    %c48 = arith.constant 48 : index
    %584 = memref.load %arg2[%c48] : memref<98xf32, #tpu.memory_space<smem>>
    %c97 = arith.constant 97 : index
    %585 = memref.load %arg2[%c97] : memref<98xf32, #tpu.memory_space<smem>>
    %586 = vector.broadcast %584 : f32 to vector<2x256xf32>
    %587 = arith.mulf %586, %3 : vector<2x256xf32>
    %588 = vector.broadcast %585 : f32 to vector<2x256xf32>
    %589 = arith.mulf %588, %4 : vector<2x256xf32>
    %590 = arith.addf %587, %589 : vector<2x256xf32>
    %c205_i32 = arith.constant 205 : i32
    %591 = tpu.dynamic_rotate %590 by %c205_i32 dim 1 : vector<2x256xf32>, i32 -> vector<2x256xf32>
    %c48_105 = arith.constant 48 : index
    %c0_106 = arith.constant 0 : index
    %592 = vector.load %arg3[%c48_105, %c0_106] : memref<49x256xf32, #tpu.memory_space<vmem>>, vector<1x256xf32>
    %593 = vector.broadcast %592 : vector<1x256xf32> to vector<2x256xf32>
    %594 = arith.mulf %593, %591 : vector<2x256xf32>
    %595 = arith.addf %547, %594 : vector<2x256xf32>
    %596 = arith.addf %595, %559 : vector<2x256xf32>
    %597 = arith.addf %571, %583 : vector<2x256xf32>
    %598 = arith.addf %596, %597 : vector<2x256xf32>
    %599 = arith.negf %598 : vector<2x256xf32>
    %600 = math.exp %599 : vector<2x256xf32>
    %cst_107 = arith.constant 1.000000e+00 : f32
    %601 = vector.broadcast %cst_107 : f32 to vector<2x256xf32>
    %602 = arith.addf %601, %600 : vector<2x256xf32>
    %603 = arith.divf %601, %602 : vector<2x256xf32>
    %c0_108 = arith.constant 0 : index
    %c0_109 = arith.constant 0 : index
    %c0_110 = arith.constant 0 : index
    %604 = vector.load %arg1[%c0_108, %c0_109, %c0_110] : memref<2x4x256xf32, #tpu.memory_space<vmem>>, vector<2x4x256xf32>
    %605 = vector.shape_cast %603 : vector<2x256xf32> to vector<2x1x256xf32>
    %606 = vector.broadcast %605 : vector<2x1x256xf32> to vector<2x4x256xf32>
    %607 = arith.mulf %604, %606 : vector<2x4x256xf32>
    %c0_111 = arith.constant 0 : index
    %c0_112 = arith.constant 0 : index
    %c0_113 = arith.constant 0 : index
    %608 = vector.load %arg4[%c0_111, %c0_112, %c0_113] : memref<2x4x256xf32, #tpu.memory_space<vmem>>, vector<2x4x256xf32>
    tpu.vector_store %arg4[%c0_111, %c0_112, %c0_113], %607 {strides = array<i32>} : memref<2x4x256xf32, #tpu.memory_space<vmem>>, vector<2x4x256xf32>,
    return
  }
  func.func @transform_0(%arg0: i32) -> (i32, i32, i32) {
    %c0_i32 = arith.constant 0 : i32
    %c0_i32_0 = arith.constant 0 : i32
    %c0_i32_1 = arith.constant 0 : i32
    return %arg0, %c0_i32, %c0_i32_0 : i32, i32, i32
  }
  func.func @transform_1(%arg0: i32) -> i32 {
    %c0_i32 = arith.constant 0 : i32
    %c0_i32_0 = arith.constant 0 : i32
    return %c0_i32 : i32
  }
  func.func @transform_2(%arg0: i32) -> (i32, i32) {
    %c0_i32 = arith.constant 0 : i32
    %c0_i32_0 = arith.constant 0 : i32
    %c0_i32_1 = arith.constant 0 : i32
    return %c0_i32, %c0_i32_0 : i32, i32
  }
  func.func @transform_3(%arg0: i32) -> (i32, i32, i32) {
    %c0_i32 = arith.constant 0 : i32
    %c0_i32_0 = arith.constant 0 : i32
    %c0_i32_1 = arith.constant 0 : i32
    return %arg0, %c0_i32, %c0_i32_0 : i32, i32, i32
  }
}

</mosaic_0001>

<llo_original>
// kernel: tpu_custom_call.1
$region0: #{tpu_custom_call.1}
  #allocation0 [shape = 'u32[]', space=smem, size = 0x4, offset = 0x4, fixed_abs, tag = 'smem constant byte address 0x4 - core index']
  #allocation1 [shape = 'u32[72,128]{1,0:T(1,128)}', space=vmem, size = 0x9000, scoped, tag = 'internal scratch']
  %s0 = inlined_call_operand.hbm [shape: f32[2,4,256], index: 0, kind: input, shape index: {}]
  %s1 = inlined_call_operand.hbm [shape: f32[98], index: 1, kind: input, shape index: {}]
  %s2 = inlined_call_operand.hbm [shape: f32[49,256], index: 2, kind: input, shape index: {}]
  %s3 = inlined_call_operand.hbm [shape: f32[2,4,256], index: 3, kind: output, shape index: {}]
  %s4 = sld [smem:[#allocation0]]
  $region34: #{tpu_custom_call.1} parent=0
    _
  %s6 = ssub.s32 1, %s4
  %s7 = scalar_select 0, %s6, %s4
  $region1: #{tpu_custom_call.1} parent=0
    #allocation2 [shape = 'u8[8192]{0}', space=vmem, size = 0x2000, scoped, tag = 'input window, operand 0, single buffered']
    #allocation3 [shape = 's32[1]{0}', space=sflag, size = 0x4, scoped, tag = 'scoped memory for tpu_custom_call.1']
    #allocation4 [shape = 's32[1]{0}', space=sflag, size = 0x4, scoped, tag = 'scoped memory for tpu_custom_call.1']
    #allocation5 [shape = 's32[1]{0}', space=sflag, size = 0x4, scoped, tag = 'scoped memory for tpu_custom_call.1']
    #allocation6 [shape = 'u8[512]{0}', space=smem, size = 0x200, scoped, tag = 'input window, operand 1, single buffered']
    #allocation7 [shape = 'u8[57344]{0}', space=vmem, size = 0xe000, scoped, tag = 'input window, operand 2, single buffered']
    #allocation8 [shape = 's32[1]{0}', space=sflag, size = 0x4, scoped, tag = 'scoped memory for tpu_custom_call.1']
    #allocation9 [shape = 'u8[8192]{0}', space=vmem, size = 0x2000, scoped, tag = 'output window, operand 0, single buffered']
    %8 = vsyncpa [#allocation3], 0
    %9 = vsyncpa [#allocation5], 0
    %10 = vsyncpa [#allocation8], 0
    %11 = vsyncpa [#allocation4], 0
    // Predicated region
    $region2: #{tpu_custom_call.1} parent=1 // pred_check
      _
    $region3: #{tpu_custom_call.1} parent=1 // pred_check_branch
      %13 = sbr.rel (0) target = $region5
    $region4: #{tpu_custom_call.1} parent=1 // pred_region
      %15 = vsyncadd [#allocation3], 0
      %s16 = sshll.u32 %s0, 4
      %s17 = int_to_ptr.hbm [resolvable:$true] %s16
      %s18 = sshll.u32 [#allocation2], 4
      %s19 = int_to_ptr.vmem [resolvable:$true] %s18
      %24 = dma.hbm_to_vmem [thread:$0]  %s17, 256, %s19, [#allocation3], 128, 128, 8
    $region5: #{tpu_custom_call.1} parent=1 // pred_fallthru
      _
    // Predicated region
    $region6: #{tpu_custom_call.1} parent=1 // pred_check
      _
    $region7: #{tpu_custom_call.1} parent=1 // pred_check_branch
      %26 = sbr.rel (0) target = $region9
    $region8: #{tpu_custom_call.1} parent=1 // pred_region
      %28 = vsyncadd [#allocation5], 0
      %s30 = sshll.u32 %s1, 4
      %s31 = int_to_ptr.hbm [resolvable:$true] %s30
      %33 = dma.hbm_to_smem %s31, 16, [#allocation6], [#allocation5]
    $region9: #{tpu_custom_call.1} parent=1 // pred_fallthru
      _
    // Predicated region
    $region10: #{tpu_custom_call.1} parent=1 // pred_check
      _
    $region11: #{tpu_custom_call.1} parent=1 // pred_check_branch
      %35 = sbr.rel (0) target = $region13
    $region12: #{tpu_custom_call.1} parent=1 // pred_region
      %37 = vsyncadd [#allocation8], 0
      %s38 = sshll.u32 %s2, 4
      %s39 = int_to_ptr.hbm [resolvable:$true] %s38
      %s40 = sshll.u32 [#allocation7], 4
      %s41 = int_to_ptr.vmem [resolvable:$true] %s40
      %46 = dma.hbm_to_vmem [thread:$0]  %s39, 1792, %s41, [#allocation8], 256, 256, 16
    $region13: #{tpu_custom_call.1} parent=1 // pred_fallthru
      _
    // Predicated region
    $region14: #{tpu_custom_call.1} parent=1 // pred_check
      _
    $region15: #{tpu_custom_call.1} parent=1 // pred_check_branch
      %48 = sbr.rel (0) target = $region17
    $region16: #{tpu_custom_call.1} parent=1 // pred_region
      %50 = dma.done [#allocation3], 256
    $region17: #{tpu_custom_call.1} parent=1 // pred_fallthru
      _
    // Predicated region
    $region18: #{tpu_custom_call.1} parent=1 // pred_check
      _
    $region19: #{tpu_custom_call.1} parent=1 // pred_check_branch
      %52 = sbr.rel (0) target = $region21
    $region20: #{tpu_custom_call.1} parent=1 // pred_region
      %54 = dma.done [#allocation5], 16
    $region21: #{tpu_custom_call.1} parent=1 // pred_fallthru
      _
    // Predicated region
    $region22: #{tpu_custom_call.1} parent=1 // pred_check
      _
    $region23: #{tpu_custom_call.1} parent=1 // pred_check_branch
      %56 = sbr.rel (0) target = $region25
    $region24: #{tpu_custom_call.1} parent=1 // pred_region
      %58 = dma.done [#allocation8], 1792
    $region25: #{tpu_custom_call.1} parent=1 // pred_fallthru
      _
    %59 = sfence
    %v60 = vld [vmem:[#allocation2] sm:$0xff]
    %v61 = vld [vmem:[#allocation2 + $0x8] sm:$0xff]
    %64 = vst [vmem:[#allocation1] ss:$2 sm:$0xff] %v60
    %v65 = vld.sshfl [vmem:[#allocation1] sm:$0xff pattern:$0x75316420]
    %v66 = vld.sshfl [vmem:[#allocation1 + $0x8] sm:$0xff pattern:$0x75316420]
    %s67 = scalar_lea.vmem [#allocation1], 16
    %68 = vst [vmem:[%s67] ss:$2 sm:$0xff] %v61
    %v69 = vld.sshfl [vmem:[#allocation1 + $0x10] sm:$0xff pattern:$0x75316420]
    %v70 = vld.sshfl [vmem:[#allocation1 + $0x18] sm:$0xff pattern:$0x75316420]
    %vm75 = vcmask 1043456
    %v76 = vsel %vm75, %v65, 0.0
    %v77 = vrot.slane %v76, 4
    %v78 = vadd.f32 %v76, %v77
    %v79 = vrot.slane %v78, 2
    %v80 = vadd.f32 %v78, %v79
    %v81 = vrot.slane %v80, 1
    %v82 = vadd.f32 %v80, %v81
    %v83 = vsel %vm75, %v66, 0.0
    %v84 = vrot.slane %v83, 4
    %v85 = vadd.f32 %v83, %v84
    %v86 = vrot.slane %v85, 2
    %v87 = vadd.f32 %v85, %v86
    %v88 = vrot.slane %v87, 1
    %v89 = vadd.f32 %v87, %v88
    %v90 = vsel %vm75, %v69, 0.0
    %v91 = vrot.slane %v90, 4
    %v92 = vadd.f32 %v90, %v91
    %v93 = vrot.slane %v92, 2
    %v94 = vadd.f32 %v92, %v93
    %v95 = vrot.slane %v94, 1
    %v96 = vadd.f32 %v94, %v95
    %v97 = vsel %vm75, %v70, 0.0
    %v98 = vrot.slane %v97, 4
    %v99 = vadd.f32 %v97, %v98
    %v100 = vrot.slane %v99, 2
    %v101 = vadd.f32 %v99, %v100
    %v102 = vrot.slane %v101, 1
    %v103 = vadd.f32 %v101, %v102
    %v104 = vmul.f32 %v82, 0.25
    %v105 = vmul.f32 %v89, 0.25
    %v106 = vmul.f32 %v96, 0.25
    %v107 = vmul.f32 %v103, 0.25
    %108 = vst [vmem:[#allocation1] ss:$2 sm:$0xff] %v60
    %v109 = vld.sshfl [vmem:[#allocation1] sm:$0xff pattern:$0x75316420]
    %v110 = vld.sshfl [vmem:[#allocation1 + $0x8] sm:$0xff pattern:$0x75316420]
    %s111 = scalar_lea.vmem [#allocation1], 16
    %112 = vst [vmem:[%s111] ss:$2 sm:$0xff] %v61
    %v113 = vld.sshfl [vmem:[#allocation1 + $0x10] sm:$0xff pattern:$0x75316420]
    %v114 = vld.sshfl [vmem:[#allocation1 + $0x18] sm:$0xff pattern:$0x75316420]
    %v119 = vsel %vm75, %v109, -inf
    %v120 = vrot.slane %v119, 4
    %v121 = vmax.f32 %v119, %v120
    %v122 = vrot.slane %v121, 2
    %v123 = vmax.f32 %v121, %v122
    %v124 = vrot.slane %v123, 1
    %v125 = vmax.f32 %v123, %v124
    %v126 = vsel %vm75, %v110, -inf
    %v127 = vrot.slane %v126, 4
    %v128 = vmax.f32 %v126, %v127
    %v129 = vrot.slane %v128, 2
    %v130 = vmax.f32 %v128, %v129
    %v131 = vrot.slane %v130, 1
    %v132 = vmax.f32 %v130, %v131
    %v133 = vsel %vm75, %v113, -inf
    %v134 = vrot.slane %v133, 4
    %v135 = vmax.f32 %v133, %v134
    %v136 = vrot.slane %v135, 2
    %v137 = vmax.f32 %v135, %v136
    %v138 = vrot.slane %v137, 1
    %v139 = vmax.f32 %v137, %v138
    %v140 = vsel %vm75, %v114, -inf
    %v141 = vrot.slane %v140, 4
    %v142 = vmax.f32 %v140, %v141
    %v143 = vrot.slane %v142, 2
    %v144 = vmax.f32 %v142, %v143
    %v145 = vrot.slane %v144, 1
    %v146 = vmax.f32 %v144, %v145
    %s147 = sld [smem:[#allocation6]]
    %s148 = sld [smem:[#allocation6 + $0x31]]
    %v149 = vstv %s147
    %v150 = vmul.f32 %v149, %v104
    %v151 = vmul.f32 %v149, %v105
    %v152 = vmul.f32 %v149, %v106
    %v153 = vmul.f32 %v149, %v107
    %v154 = vstv %s148
    %v155 = vmul.f32 %v154, %v125
    %v156 = vmul.f32 %v154, %v132
    %v157 = vmul.f32 %v154, %v139
    %v158 = vmul.f32 %v154, %v146
    %v159 = vadd.f32 %v150, %v155
    %v160 = vadd.f32 %v151, %v156
    %v161 = vadd.f32 %v152, %v157
    %v162 = vadd.f32 %v153, %v158
    %vm167 = vcmask 1041409
    %v168 = vsel %vm167, %v161, %v159
    %v169 = vsel %vm167, %v162, %v160
    %172 = vrot.lane.b32.xlu0 %v168, 51
    %v173 = vpop.permute.xlu0 %172
    %174 = vrot.lane.b32.xlu0 %v169, 51
    %v175 = vpop.permute.xlu0 %174
    %v176 = vlaneseq
    %v177 = vand.u32 %v176, 127
    %vm178 = vcmp.lt.s32.totalorder %v177, 51
    %v179 = vsel %vm178, %v173, %v175
    %v180 = vsel %vm178, %v175, %v173
    %v181 = vld [vmem:[#allocation7] ss:$8 sm:$0x3]
    %v183 = vperm.slane %v181, 0
    %v184 = vperm.slane %v181, 1
    %v187 = vmul.f32 %v183, %v180
    %v188 = vmul.f32 %v184, %v179
    %v189 = vadd.f32 %v187, 0.0
    %v190 = vadd.f32 %v188, 0.0
    %s191 = sld [smem:[#allocation6 + $0x1]]
    %s192 = sld [smem:[#allocation6 + $0x32]]
    %v193 = vstv %s191
    %v194 = vmul.f32 %v193, %v104
    %v195 = vmul.f32 %v193, %v105
    %v196 = vmul.f32 %v193, %v106
    %v197 = vmul.f32 %v193, %v107
    %v198 = vstv %s192
    %v199 = vmul.f32 %v198, %v125
    %v200 = vmul.f32 %v198, %v132
    %v201 = vmul.f32 %v198, %v139
    %v202 = vmul.f32 %v198, %v146
    %v203 = vadd.f32 %v194, %v199
    %v204 = vadd.f32 %v195, %v200
    %v205 = vadd.f32 %v196, %v201
    %v206 = vadd.f32 %v197, %v202
    %v211 = vsel %vm167, %v205, %v203
    %v212 = vsel %vm167, %v206, %v204
    %215 = vrot.lane.b32.xlu0 %v211, 50
    %v216 = vpop.permute.xlu0 %215
    %217 = vrot.lane.b32.xlu0 %v212, 50
    %v218 = vpop.permute.xlu0 %217
    %vm219 = vcmp.lt.s32.totalorder %v177, 50
    %v220 = vsel %vm219, %v216, %v218
    %v221 = vsel %vm219, %v218, %v216
    %s222 = scalar_lea.vmem [#allocation7], 1
    %v223 = vld [vmem:[%s222] ss:$8 sm:$0x3]
    %v225 = vperm.slane %v223, 0
    %v226 = vperm.slane %v223, 1
    %v229 = vmul.f32 %v225, %v221
    %v230 = vmul.f32 %v226, %v220
    %v231 = vadd.f32 %v229, 0.0
    %v232 = vadd.f32 %v230, 0.0
    %s233 = sld [smem:[#allocation6 + $0x2]]
    %s234 = sld [smem:[#allocation6 + $0x33]]
    %v235 = vstv %s233
    %v236 = vmul.f32 %v235, %v104
    %v237 = vmul.f32 %v235, %v105
    %v238 = vmul.f32 %v235, %v106
    %v239 = vmul.f32 %v235, %v107
    %v240 = vstv %s234
    %v241 = vmul.f32 %v240, %v125
    %v242 = vmul.f32 %v240, %v132
    %v243 = vmul.f32 %v240, %v139
    %v244 = vmul.f32 %v240, %v146
    %v245 = vadd.f32 %v236, %v241
    %v246 = vadd.f32 %v237, %v242
    %v247 = vadd.f32 %v238, %v243
    %v248 = vadd.f32 %v239, %v244
    %v253 = vsel %vm167, %v247, %v245
    %v254 = vsel %vm167, %v248, %v246
    %257 = vrot.lane.b32.xlu0 %v253, 49
    %v258 = vpop.permute.xlu0 %257
    %259 = vrot.lane.b32.xlu0 %v254, 49
    %v260 = vpop.permute.xlu0 %259
    %vm261 = vcmp.lt.s32.totalorder %v177, 49
    %v262 = vsel %vm261, %v258, %v260
    %v263 = vsel %vm261, %v260, %v258
    %s264 = scalar_lea.vmem [#allocation7], 2
    %v265 = vld [vmem:[%s264] ss:$8 sm:$0x3]
    %v267 = vperm.slane %v265, 0
    %v268 = vperm.slane %v265, 1
    %v271 = vmul.f32 %v267, %v263
    %v272 = vmul.f32 %v268, %v262
    %v273 = vadd.f32 %v271, 0.0
    %v274 = vadd.f32 %v272, 0.0
    %s275 = sld [smem:[#allocation6 + $0x3]]
    %s276 = sld [smem:[#allocation6 + $0x34]]
    %v277 = vstv %s275
    %v278 = vmul.f32 %v277, %v104
    %v279 = vmul.f32 %v277, %v105
    %v280 = vmul.f32 %v277, %v106
    %v281 = vmul.f32 %v277, %v107
    %v282 = vstv %s276
    %v283 = vmul.f32 %v282, %v125
    %v284 = vmul.f32 %v282, %v132
    %v285 = vmul.f32 %v282, %v139
    %v286 = vmul.f32 %v282, %v146
    %v287 = vadd.f32 %v278, %v283
    %v288 = vadd.f32 %v279, %v284
    %v289 = vadd.f32 %v280, %v285
    %v290 = vadd.f32 %v281, %v286
    %v295 = vsel %vm167, %v289, %v287
    %v296 = vsel %vm167, %v290, %v288
    %299 = vrot.lane.b32.xlu0 %v295, 48
    %v300 = vpop.permute.xlu0 %299
    %301 = vrot.lane.b32.xlu0 %v296, 48
    %v302 = vpop.permute.xlu0 %301
    %vm303 = vcmp.lt.s32.totalorder %v177, 48
    %v304 = vsel %vm303, %v300, %v302
    %v305 = vsel %vm303, %v302, %v300
    %s306 = scalar_lea.vmem [#allocation7], 3
    %v307 = vld [vmem:[%s306] ss:$8 sm:$0x3]
    %v309 = vperm.slane %v307, 0
    %v310 = vperm.slane %v307, 1
    %v313 = vmul.f32 %v309, %v305
    %v314 = vmul.f32 %v310, %v304
    %v315 = vadd.f32 %v313, 0.0
    %v316 = vadd.f32 %v314, 0.0
    %s317 = sld [smem:[#allocation6 + $0x4]]
    %s318 = sld [smem:[#allocation6 + $0x35]]
    %v319 = vstv %s317
    %v320 = vmul.f32 %v319, %v104
    %v321 = vmul.f32 %v319, %v105
    %v322 = vmul.f32 %v319, %v106
    %v323 = vmul.f32 %v319, %v107
    %v324 = vstv %s318
    %v325 = vmul.f32 %v324, %v125
    %v326 = vmul.f32 %v324, %v132
    %v327 = vmul.f32 %v324, %v139
    %v328 = vmul.f32 %v324, %v146
    %v329 = vadd.f32 %v320, %v325
    %v330 = vadd.f32 %v321, %v326
    %v331 = vadd.f32 %v322, %v327
    %v332 = vadd.f32 %v323, %v328
    %v337 = vsel %vm167, %v331, %v329
    %v338 = vsel %vm167, %v332, %v330
    %341 = vrot.lane.b32.xlu0 %v337, 47
    %v342 = vpop.permute.xlu0 %341
    %343 = vrot.lane.b32.xlu0 %v338, 47
    %v344 = vpop.permute.xlu0 %343
    %vm345 = vcmp.lt.s32.totalorder %v177, 47
    %v346 = vsel %vm345, %v342, %v344
    %v347 = vsel %vm345, %v344, %v342
    %s348 = scalar_lea.vmem [#allocation7], 4
    %v349 = vld [vmem:[%s348] ss:$8 sm:$0x3]
    %v351 = vperm.slane %v349, 0
    %v352 = vperm.slane %v349, 1
    %v355 = vmul.f32 %v351, %v347
    %v356 = vmul.f32 %v352, %v346
    %v357 = vadd.f32 %v189, %v355
    %v358 = vadd.f32 %v190, %v356
    %s359 = sld [smem:[#allocation6 + $0x5]]
    %s360 = sld [smem:[#allocation6 + $0x36]]
    %v361 = vstv %s359
    %v362 = vmul.f32 %v361, %v104
    %v363 = vmul.f32 %v361, %v105
    %v364 = vmul.f32 %v361, %v106
    %v365 = vmul.f32 %v361, %v107
    %v366 = vstv %s360
    %v367 = vmul.f32 %v366, %v125
    %v368 = vmul.f32 %v366, %v132
    %v369 = vmul.f32 %v366, %v139
    %v370 = vmul.f32 %v366, %v146
    %v371 = vadd.f32 %v362, %v367
    %v372 = vadd.f32 %v363, %v368
    %v373 = vadd.f32 %v364, %v369
    %v374 = vadd.f32 %v365, %v370
    %v379 = vsel %vm167, %v373, %v371
    %v380 = vsel %vm167, %v374, %v372
    %383 = vrot.lane.b32.xlu0 %v379, 46
    %v384 = vpop.permute.xlu0 %383
    %385 = vrot.lane.b32.xlu0 %v380, 46
    %v386 = vpop.permute.xlu0 %385
    %vm387 = vcmp.lt.s32.totalorder %v177, 46
    %v388 = vsel %vm387, %v384, %v386
    %v389 = vsel %vm387, %v386, %v384
    %s390 = scalar_lea.vmem [#allocation7], 5
    %v391 = vld [vmem:[%s390] ss:$8 sm:$0x3]
    %v393 = vperm.slane %v391, 0
    %v394 = vperm.slane %v391, 1
    %v397 = vmul.f32 %v393, %v389
    %v398 = vmul.f32 %v394, %v388
    %v399 = vadd.f32 %v231, %v397
    %v400 = vadd.f32 %v232, %v398
    %s401 = sld [smem:[#allocation6 + $0x6]]
    %s402 = sld [smem:[#allocation6 + $0x37]]
    %v403 = vstv %s401
    %v404 = vmul.f32 %v403, %v104
    %v405 = vmul.f32 %v403, %v105
    %v406 = vmul.f32 %v403, %v106
    %v407 = vmul.f32 %v403, %v107
    %v408 = vstv %s402
    %v409 = vmul.f32 %v408, %v125
    %v410 = vmul.f32 %v408, %v132
    %v411 = vmul.f32 %v408, %v139
    %v412 = vmul.f32 %v408, %v146
    %v413 = vadd.f32 %v404, %v409
    %v414 = vadd.f32 %v405, %v410
    %v415 = vadd.f32 %v406, %v411
    %v416 = vadd.f32 %v407, %v412
    %v421 = vsel %vm167, %v415, %v413
    %v422 = vsel %vm167, %v416, %v414
    %425 = vrot.lane.b32.xlu0 %v421, 45
    %v426 = vpop.permute.xlu0 %425
    %427 = vrot.lane.b32.xlu0 %v422, 45
    %v428 = vpop.permute.xlu0 %427
    %vm429 = vcmp.lt.s32.totalorder %v177, 45
    %v430 = vsel %vm429, %v426, %v428
    %v431 = vsel %vm429, %v428, %v426
    %s432 = scalar_lea.vmem [#allocation7], 6
    %v433 = vld [vmem:[%s432] ss:$8 sm:$0x3]
    %v435 = vperm.slane %v433, 0
    %v436 = vperm.slane %v433, 1
    %v439 = vmul.f32 %v435, %v431
    %v440 = vmul.f32 %v436, %v430
    %v441 = vadd.f32 %v273, %v439
    %v442 = vadd.f32 %v274, %v440
    %s443 = sld [smem:[#allocation6 + $0x7]]
    %s444 = sld [smem:[#allocation6 + $0x38]]
    %v445 = vstv %s443
    %v446 = vmul.f32 %v445, %v104
    %v447 = vmul.f32 %v445, %v105
    %v448 = vmul.f32 %v445, %v106
    %v449 = vmul.f32 %v445, %v107
    %v450 = vstv %s444
    %v451 = vmul.f32 %v450, %v125
    %v452 = vmul.f32 %v450, %v132
    %v453 = vmul.f32 %v450, %v139
    %v454 = vmul.f32 %v450, %v146
    %v455 = vadd.f32 %v446, %v451
    %v456 = vadd.f32 %v447, %v452
    %v457 = vadd.f32 %v448, %v453
    %v458 = vadd.f32 %v449, %v454
    %v463 = vsel %vm167, %v457, %v455
    %v464 = vsel %vm167, %v458, %v456
    %467 = vrot.lane.b32.xlu0 %v463, 35
    %v468 = vpop.permute.xlu0 %467
    %469 = vrot.lane.b32.xlu0 %v464, 35
    %v470 = vpop.permute.xlu0 %469
    %vm471 = vcmp.lt.s32.totalorder %v177, 35
    %v472 = vsel %vm471, %v468, %v470
    %v473 = vsel %vm471, %v470, %v468
    %s474 = scalar_lea.vmem [#allocation7], 7
    %v475 = vld [vmem:[%s474] ss:$8 sm:$0x3]
    %v477 = vperm.slane %v475, 0
    %v478 = vperm.slane %v475, 1
    %v481 = vmul.f32 %v477, %v473
    %v482 = vmul.f32 %v478, %v472
    %v483 = vadd.f32 %v315, %v481
    %v484 = vadd.f32 %v316, %v482
    %s485 = sld [smem:[#allocation6 + $0x8]]
    %s486 = sld [smem:[#allocation6 + $0x39]]
    %v487 = vstv %s485
    %v488 = vmul.f32 %v487, %v104
    %v489 = vmul.f32 %v487, %v105
    %v490 = vmul.f32 %v487, %v106
    %v491 = vmul.f32 %v487, %v107
    %v492 = vstv %s486
    %v493 = vmul.f32 %v492, %v125
    %v494 = vmul.f32 %v492, %v132
    %v495 = vmul.f32 %v492, %v139
    %v496 = vmul.f32 %v492, %v146
    %v497 = vadd.f32 %v488, %v493
    %v498 = vadd.f32 %v489, %v494
    %v499 = vadd.f32 %v490, %v495
    %v500 = vadd.f32 %v491, %v496
    %v505 = vsel %vm167, %v499, %v497
    %v506 = vsel %vm167, %v500, %v498
    %509 = vrot.lane.b32.xlu0 %v505, 34
    %v510 = vpop.permute.xlu0 %509
    %511 = vrot.lane.b32.xlu0 %v506, 34
    %v512 = vpop.permute.xlu0 %511
    %vm513 = vcmp.lt.s32.totalorder %v177, 34
    %v514 = vsel %vm513, %v510, %v512
    %v515 = vsel %vm513, %v512, %v510
    %s516 = scalar_lea.vmem [#allocation7], 16
    %v517 = vld [vmem:[%s516] ss:$8 sm:$0x3]
    %v519 = vperm.slane %v517, 0
    %v520 = vperm.slane %v517, 1
    %v523 = vmul.f32 %v519, %v515
    %v524 = vmul.f32 %v520, %v514
    %v525 = vadd.f32 %v357, %v523
    %v526 = vadd.f32 %v358, %v524
    %s527 = sld [smem:[#allocation6 + $0x9]]
    %s528 = sld [smem:[#allocation6 + $0x3a]]
    %v529 = vstv %s527
    %v530 = vmul.f32 %v529, %v104
    %v531 = vmul.f32 %v529, %v105
    %v532 = vmul.f32 %v529, %v106
    %v533 = vmul.f32 %v529, %v107
    %v534 = vstv %s528
    %v535 = vmul.f32 %v534, %v125
    %v536 = vmul.f32 %v534, %v132
    %v537 = vmul.f32 %v534, %v139
    %v538 = vmul.f32 %v534, %v146
    %v539 = vadd.f32 %v530, %v535
    %v540 = vadd.f32 %v531, %v536
    %v541 = vadd.f32 %v532, %v537
    %v542 = vadd.f32 %v533, %v538
    %v547 = vsel %vm167, %v541, %v539
    %v548 = vsel %vm167, %v542, %v540
    %551 = vrot.lane.b32.xlu0 %v547, 33
    %v552 = vpop.permute.xlu0 %551
    %553 = vrot.lane.b32.xlu0 %v548, 33
    %v554 = vpop.permute.xlu0 %553
    %vm555 = vcmp.lt.s32.totalorder %v177, 33
    %v556 = vsel %vm555, %v552, %v554
    %v557 = vsel %vm555, %v554, %v552
    %s558 = scalar_lea.vmem [#allocation7], 17
    %v559 = vld [vmem:[%s558] ss:$8 sm:$0x3]
    %v561 = vperm.slane %v559, 0
    %v562 = vperm.slane %v559, 1
    %v565 = vmul.f32 %v561, %v557
    %v566 = vmul.f32 %v562, %v556
    %v567 = vadd.f32 %v399, %v565
    %v568 = vadd.f32 %v400, %v566
    %s569 = sld [smem:[#allocation6 + $0xa]]
    %s570 = sld [smem:[#allocation6 + $0x3b]]
    %v571 = vstv %s569
    %v572 = vmul.f32 %v571, %v104
    %v573 = vmul.f32 %v571, %v105
    %v574 = vmul.f32 %v571, %v106
    %v575 = vmul.f32 %v571, %v107
    %v576 = vstv %s570
    %v577 = vmul.f32 %v576, %v125
    %v578 = vmul.f32 %v576, %v132
    %v579 = vmul.f32 %v576, %v139
    %v580 = vmul.f32 %v576, %v146
    %v581 = vadd.f32 %v572, %v577
    %v582 = vadd.f32 %v573, %v578
    %v583 = vadd.f32 %v574, %v579
    %v584 = vadd.f32 %v575, %v580
    %v589 = vsel %vm167, %v583, %v581
    %v590 = vsel %vm167, %v584, %v582
    %593 = vrot.lane.b32.xlu0 %v589, 32
    %v594 = vpop.permute.xlu0 %593
    %595 = vrot.lane.b32.xlu0 %v590, 32
    %v596 = vpop.permute.xlu0 %595
    %vm597 = vcmp.lt.s32.totalorder %v177, 32
    %v598 = vsel %vm597, %v594, %v596
    %v599 = vsel %vm597, %v596, %v594
    %s600 = scalar_lea.vmem [#allocation7], 18
    %v601 = vld [vmem:[%s600] ss:$8 sm:$0x3]
    %v603 = vperm.slane %v601, 0
    %v604 = vperm.slane %v601, 1
    %v607 = vmul.f32 %v603, %v599
    %v608 = vmul.f32 %v604, %v598
    %v609 = vadd.f32 %v441, %v607
    %v610 = vadd.f32 %v442, %v608
    %s611 = sld [smem:[#allocation6 + $0xb]]
    %s612 = sld [smem:[#allocation6 + $0x3c]]
    %v613 = vstv %s611
    %v614 = vmul.f32 %v613, %v104
    %v615 = vmul.f32 %v613, %v105
    %v616 = vmul.f32 %v613, %v106
    %v617 = vmul.f32 %v613, %v107
    %v618 = vstv %s612
    %v619 = vmul.f32 %v618, %v125
    %v620 = vmul.f32 %v618, %v132
    %v621 = vmul.f32 %v618, %v139
    %v622 = vmul.f32 %v618, %v146
    %v623 = vadd.f32 %v614, %v619
    %v624 = vadd.f32 %v615, %v620
    %v625 = vadd.f32 %v616, %v621
    %v626 = vadd.f32 %v617, %v622
    %v631 = vsel %vm167, %v625, %v623
    %v632 = vsel %vm167, %v626, %v624
    %635 = vrot.lane.b32.xlu0 %v631, 31
    %v636 = vpop.permute.xlu0 %635
    %637 = vrot.lane.b32.xlu0 %v632, 31
    %v638 = vpop.permute.xlu0 %637
    %vm639 = vcmp.lt.s32.totalorder %v177, 31
    %v640 = vsel %vm639, %v636, %v638
    %v641 = vsel %vm639, %v638, %v636
    %s642 = scalar_lea.vmem [#allocation7], 19
    %v643 = vld [vmem:[%s642] ss:$8 sm:$0x3]
    %v645 = vperm.slane %v643, 0
    %v646 = vperm.slane %v643, 1
    %v649 = vmul.f32 %v645, %v641
    %v650 = vmul.f32 %v646, %v640
    %v651 = vadd.f32 %v483, %v649
    %v652 = vadd.f32 %v484, %v650
    %s653 = sld [smem:[#allocation6 + $0xc]]
    %s654 = sld [smem:[#allocation6 + $0x3d]]
    %v655 = vstv %s653
    %v656 = vmul.f32 %v655, %v104
    %v657 = vmul.f32 %v655, %v105
    %v658 = vmul.f32 %v655, %v106
    %v659 = vmul.f32 %v655, %v107
    %v660 = vstv %s654
    %v661 = vmul.f32 %v660, %v125
    %v662 = vmul.f32 %v660, %v132
    %v663 = vmul.f32 %v660, %v139
    %v664 = vmul.f32 %v660, %v146
    %v665 = vadd.f32 %v656, %v661
    %v666 = vadd.f32 %v657, %v662
    %v667 = vadd.f32 %v658, %v663
    %v668 = vadd.f32 %v659, %v664
    %v673 = vsel %vm167, %v667, %v665
    %v674 = vsel %vm167, %v668, %v666
    %677 = vrot.lane.b32.xlu0 %v673, 30
    %v678 = vpop.permute.xlu0 %677
    %679 = vrot.lane.b32.xlu0 %v674, 30
    %v680 = vpop.permute.xlu0 %679
    %vm681 = vcmp.lt.s32.totalorder %v177, 30
    %v682 = vsel %vm681, %v678, %v680
    %v683 = vsel %vm681, %v680, %v678
    %s684 = scalar_lea.vmem [#allocation7], 20
    %v685 = vld [vmem:[%s684] ss:$8 sm:$0x3]
    %v687 = vperm.slane %v685, 0
    %v688 = vperm.slane %v685, 1
    %v691 = vmul.f32 %v687, %v683
    %v692 = vmul.f32 %v688, %v682
    %v693 = vadd.f32 %v525, %v691
    %v694 = vadd.f32 %v526, %v692
    %s695 = sld [smem:[#allocation6 + $0xd]]
    %s696 = sld [smem:[#allocation6 + $0x3e]]
    %v697 = vstv %s695
    %v698 = vmul.f32 %v697, %v104
    %v699 = vmul.f32 %v697, %v105
    %v700 = vmul.f32 %v697, %v106
    %v701 = vmul.f32 %v697, %v107
    %v702 = vstv %s696
    %v703 = vmul.f32 %v702, %v125
    %v704 = vmul.f32 %v702, %v132
    %v705 = vmul.f32 %v702, %v139
    %v706 = vmul.f32 %v702, %v146
    %v707 = vadd.f32 %v698, %v703
    %v708 = vadd.f32 %v699, %v704
    %v709 = vadd.f32 %v700, %v705
    %v710 = vadd.f32 %v701, %v706
    %v715 = vsel %vm167, %v709, %v707
    %v716 = vsel %vm167, %v710, %v708
    %719 = vrot.lane.b32.xlu0 %v715, 29
    %v720 = vpop.permute.xlu0 %719
    %721 = vrot.lane.b32.xlu0 %v716, 29
    %v722 = vpop.permute.xlu0 %721
    %vm723 = vcmp.lt.s32.totalorder %v177, 29
    %v724 = vsel %vm723, %v720, %v722
    %v725 = vsel %vm723, %v722, %v720
    %s726 = scalar_lea.vmem [#allocation7], 21
    %v727 = vld [vmem:[%s726] ss:$8 sm:$0x3]
    %v729 = vperm.slane %v727, 0
    %v730 = vperm.slane %v727, 1
    %v733 = vmul.f32 %v729, %v725
    %v734 = vmul.f32 %v730, %v724
    %v735 = vadd.f32 %v567, %v733
    %v736 = vadd.f32 %v568, %v734
    %s737 = sld [smem:[#allocation6 + $0xe]]
    %s738 = sld [smem:[#allocation6 + $0x3f]]
    %v739 = vstv %s737
    %v740 = vmul.f32 %v739, %v104
    %v741 = vmul.f32 %v739, %v105
    %v742 = vmul.f32 %v739, %v106
    %v743 = vmul.f32 %v739, %v107
    %v744 = vstv %s738
    %v745 = vmul.f32 %v744, %v125
    %v746 = vmul.f32 %v744, %v132
    %v747 = vmul.f32 %v744, %v139
    %v748 = vmul.f32 %v744, %v146
    %v749 = vadd.f32 %v740, %v745
    %v750 = vadd.f32 %v741, %v746
    %v751 = vadd.f32 %v742, %v747
    %v752 = vadd.f32 %v743, %v748
    %v757 = vsel %vm167, %v751, %v749
    %v758 = vsel %vm167, %v752, %v750
    %761 = vrot.lane.b32.xlu0 %v757, 19
    %v762 = vpop.permute.xlu0 %761
    %763 = vrot.lane.b32.xlu0 %v758, 19
    %v764 = vpop.permute.xlu0 %763
    %vm765 = vcmp.lt.s32.totalorder %v177, 19
    %v766 = vsel %vm765, %v762, %v764
    %v767 = vsel %vm765, %v764, %v762
    %s768 = scalar_lea.vmem [#allocation7], 22
    %v769 = vld [vmem:[%s768] ss:$8 sm:$0x3]
    %v771 = vperm.slane %v769, 0
    %v772 = vperm.slane %v769, 1
    %v775 = vmul.f32 %v771, %v767
    %v776 = vmul.f32 %v772, %v766
    %v777 = vadd.f32 %v609, %v775
    %v778 = vadd.f32 %v610, %v776
    %s779 = sld [smem:[#allocation6 + $0xf]]
    %s780 = sld [smem:[#allocation6 + $0x40]]
    %v781 = vstv %s779
    %v782 = vmul.f32 %v781, %v104
    %v783 = vmul.f32 %v781, %v105
    %v784 = vmul.f32 %v781, %v106
    %v785 = vmul.f32 %v781, %v107
    %v786 = vstv %s780
    %v787 = vmul.f32 %v786, %v125
    %v788 = vmul.f32 %v786, %v132
    %v789 = vmul.f32 %v786, %v139
    %v790 = vmul.f32 %v786, %v146
    %v791 = vadd.f32 %v782, %v787
    %v792 = vadd.f32 %v783, %v788
    %v793 = vadd.f32 %v784, %v789
    %v794 = vadd.f32 %v785, %v790
    %v799 = vsel %vm167, %v793, %v791
    %v800 = vsel %vm167, %v794, %v792
    %803 = vrot.lane.b32.xlu0 %v799, 18
    %v804 = vpop.permute.xlu0 %803
    %805 = vrot.lane.b32.xlu0 %v800, 18
    %v806 = vpop.permute.xlu0 %805
    %vm807 = vcmp.lt.s32.totalorder %v177, 18
    %v808 = vsel %vm807, %v804, %v806
    %v809 = vsel %vm807, %v806, %v804
    %s810 = scalar_lea.vmem [#allocation7], 23
    %v811 = vld [vmem:[%s810] ss:$8 sm:$0x3]
    %v813 = vperm.slane %v811, 0
    %v814 = vperm.slane %v811, 1
    %v817 = vmul.f32 %v813, %v809
    %v818 = vmul.f32 %v814, %v808
    %v819 = vadd.f32 %v651, %v817
    %v820 = vadd.f32 %v652, %v818
    %s821 = sld [smem:[#allocation6 + $0x10]]
    %s822 = sld [smem:[#allocation6 + $0x41]]
    %v823 = vstv %s821
    %v824 = vmul.f32 %v823, %v104
    %v825 = vmul.f32 %v823, %v105
    %v826 = vmul.f32 %v823, %v106
    %v827 = vmul.f32 %v823, %v107
    %v828 = vstv %s822
    %v829 = vmul.f32 %v828, %v125
    %v830 = vmul.f32 %v828, %v132
    %v831 = vmul.f32 %v828, %v139
    %v832 = vmul.f32 %v828, %v146
    %v833 = vadd.f32 %v824, %v829
    %v834 = vadd.f32 %v825, %v830
    %v835 = vadd.f32 %v826, %v831
    %v836 = vadd.f32 %v827, %v832
    %v841 = vsel %vm167, %v835, %v833
    %v842 = vsel %vm167, %v836, %v834
    %845 = vrot.lane.b32.xlu0 %v841, 17
    %v846 = vpop.permute.xlu0 %845
    %847 = vrot.lane.b32.xlu0 %v842, 17
    %v848 = vpop.permute.xlu0 %847
    %vm849 = vcmp.lt.s32.totalorder %v177, 17
    %v850 = vsel %vm849, %v846, %v848
    %v851 = vsel %vm849, %v848, %v846
    %s852 = scalar_lea.vmem [#allocation7], 32
    %v853 = vld [vmem:[%s852] ss:$8 sm:$0x3]
    %v855 = vperm.slane %v853, 0
    %v856 = vperm.slane %v853, 1
    %v859 = vmul.f32 %v855, %v851
    %v860 = vmul.f32 %v856, %v850
    %v861 = vadd.f32 %v693, %v859
    %v862 = vadd.f32 %v694, %v860
    %s863 = sld [smem:[#allocation6 + $0x11]]
    %s864 = sld [smem:[#allocation6 + $0x42]]
    %v865 = vstv %s863
    %v866 = vmul.f32 %v865, %v104
    %v867 = vmul.f32 %v865, %v105
    %v868 = vmul.f32 %v865, %v106
    %v869 = vmul.f32 %v865, %v107
    %v870 = vstv %s864
    %v871 = vmul.f32 %v870, %v125
    %v872 = vmul.f32 %v870, %v132
    %v873 = vmul.f32 %v870, %v139
    %v874 = vmul.f32 %v870, %v146
    %v875 = vadd.f32 %v866, %v871
    %v876 = vadd.f32 %v867, %v872
    %v877 = vadd.f32 %v868, %v873
    %v878 = vadd.f32 %v869, %v874
    %v883 = vsel %vm167, %v877, %v875
    %v884 = vsel %vm167, %v878, %v876
    %887 = vrot.lane.b32.xlu0 %v883, 16
    %v888 = vpop.permute.xlu0 %887
    %889 = vrot.lane.b32.xlu0 %v884, 16
    %v890 = vpop.permute.xlu0 %889
    %vm891 = vcmp.lt.s32.totalorder %v177, 16
    %v892 = vsel %vm891, %v888, %v890
    %v893 = vsel %vm891, %v890, %v888
    %s894 = scalar_lea.vmem [#allocation7], 33
    %v895 = vld [vmem:[%s894] ss:$8 sm:$0x3]
    %v897 = vperm.slane %v895, 0
    %v898 = vperm.slane %v895, 1
    %v901 = vmul.f32 %v897, %v893
    %v902 = vmul.f32 %v898, %v892
    %v903 = vadd.f32 %v735, %v901
    %v904 = vadd.f32 %v736, %v902
    %s905 = sld [smem:[#allocation6 + $0x12]]
    %s906 = sld [smem:[#allocation6 + $0x43]]
    %v907 = vstv %s905
    %v908 = vmul.f32 %v907, %v104
    %v909 = vmul.f32 %v907, %v105
    %v910 = vmul.f32 %v907, %v106
    %v911 = vmul.f32 %v907, %v107
    %v912 = vstv %s906
    %v913 = vmul.f32 %v912, %v125
    %v914 = vmul.f32 %v912, %v132
    %v915 = vmul.f32 %v912, %v139
    %v916 = vmul.f32 %v912, %v146
    %v917 = vadd.f32 %v908, %v913
    %v918 = vadd.f32 %v909, %v914
    %v919 = vadd.f32 %v910, %v915
    %v920 = vadd.f32 %v911, %v916
    %v925 = vsel %vm167, %v919, %v917
    %v926 = vsel %vm167, %v920, %v918
    %929 = vrot.lane.b32.xlu0 %v925, 15
    %v930 = vpop.permute.xlu0 %929
    %931 = vrot.lane.b32.xlu0 %v926, 15
    %v932 = vpop.permute.xlu0 %931
    %vm933 = vcmp.lt.s32.totalorder %v177, 15
    %v934 = vsel %vm933, %v930, %v932
    %v935 = vsel %vm933, %v932, %v930
    %s936 = scalar_lea.vmem [#allocation7], 34
    %v937 = vld [vmem:[%s936] ss:$8 sm:$0x3]
    %v939 = vperm.slane %v937, 0
    %v940 = vperm.slane %v937, 1
    %v943 = vmul.f32 %v939, %v935
    %v944 = vmul.f32 %v940, %v934
    %v945 = vadd.f32 %v777, %v943
    %v946 = vadd.f32 %v778, %v944
    %s947 = sld [smem:[#allocation6 + $0x13]]
    %s948 = sld [smem:[#allocation6 + $0x44]]
    %v949 = vstv %s947
    %v950 = vmul.f32 %v949, %v104
    %v951 = vmul.f32 %v949, %v105
    %v952 = vmul.f32 %v949, %v106
    %v953 = vmul.f32 %v949, %v107
    %v954 = vstv %s948
    %v955 = vmul.f32 %v954, %v125
    %v956 = vmul.f32 %v954, %v132
    %v957 = vmul.f32 %v954, %v139
    %v958 = vmul.f32 %v954, %v146
    %v959 = vadd.f32 %v950, %v955
    %v960 = vadd.f32 %v951, %v956
    %v961 = vadd.f32 %v952, %v957
    %v962 = vadd.f32 %v953, %v958
    %v967 = vsel %vm167, %v961, %v959
    %v968 = vsel %vm167, %v962, %v960
    %971 = vrot.lane.b32.xlu0 %v967, 14
    %v972 = vpop.permute.xlu0 %971
    %973 = vrot.lane.b32.xlu0 %v968, 14
    %v974 = vpop.permute.xlu0 %973
    %vm975 = vcmp.lt.s32.totalorder %v177, 14
    %v976 = vsel %vm975, %v972, %v974
    %v977 = vsel %vm975, %v974, %v972
    %s978 = scalar_lea.vmem [#allocation7], 35
    %v979 = vld [vmem:[%s978] ss:$8 sm:$0x3]
    %v981 = vperm.slane %v979, 0
    %v982 = vperm.slane %v979, 1
    %v985 = vmul.f32 %v981, %v977
    %v986 = vmul.f32 %v982, %v976
    %v987 = vadd.f32 %v819, %v985
    %v988 = vadd.f32 %v820, %v986
    %s989 = sld [smem:[#allocation6 + $0x14]]
    %s990 = sld [smem:[#allocation6 + $0x45]]
    %v991 = vstv %s989
    %v992 = vmul.f32 %v991, %v104
    %v993 = vmul.f32 %v991, %v105
    %v994 = vmul.f32 %v991, %v106
    %v995 = vmul.f32 %v991, %v107
    %v996 = vstv %s990
    %v997 = vmul.f32 %v996, %v125
    %v998 = vmul.f32 %v996, %v132
    %v999 = vmul.f32 %v996, %v139
    %v1000 = vmul.f32 %v996, %v146
    %v1001 = vadd.f32 %v992, %v997
    %v1002 = vadd.f32 %v993, %v998
    %v1003 = vadd.f32 %v994, %v999
    %v1004 = vadd.f32 %v995, %v1000
    %v1009 = vsel %vm167, %v1003, %v1001
    %v1010 = vsel %vm167, %v1004, %v1002
    %1013 = vrot.lane.b32.xlu0 %v1009, 13
    %v1014 = vpop.permute.xlu0 %1013
    %1015 = vrot.lane.b32.xlu0 %v1010, 13
    %v1016 = vpop.permute.xlu0 %1015
    %vm1017 = vcmp.lt.s32.totalorder %v177, 13
    %v1018 = vsel %vm1017, %v1014, %v1016
    %v1019 = vsel %vm1017, %v1016, %v1014
    %s1020 = scalar_lea.vmem [#allocation7], 36
    %v1021 = vld [vmem:[%s1020] ss:$8 sm:$0x3]
    %v1023 = vperm.slane %v1021, 0
    %v1024 = vperm.slane %v1021, 1
    %v1027 = vmul.f32 %v1023, %v1019
    %v1028 = vmul.f32 %v1024, %v1018
    %v1029 = vadd.f32 %v861, %v1027
    %v1030 = vadd.f32 %v862, %v1028
    %s1031 = sld [smem:[#allocation6 + $0x15]]
    %s1032 = sld [smem:[#allocation6 + $0x46]]
    %v1033 = vstv %s1031
    %v1034 = vmul.f32 %v1033, %v104
    %v1035 = vmul.f32 %v1033, %v105
    %v1036 = vmul.f32 %v1033, %v106
    %v1037 = vmul.f32 %v1033, %v107
    %v1038 = vstv %s1032
    %v1039 = vmul.f32 %v1038, %v125
    %v1040 = vmul.f32 %v1038, %v132
    %v1041 = vmul.f32 %v1038, %v139
    %v1042 = vmul.f32 %v1038, %v146
    %v1043 = vadd.f32 %v1034, %v1039
    %v1044 = vadd.f32 %v1035, %v1040
    %v1045 = vadd.f32 %v1036, %v1041
    %v1046 = vadd.f32 %v1037, %v1042
    %v1051 = vsel %vm167, %v1045, %v1043
    %v1052 = vsel %vm167, %v1046, %v1044
    %1055 = vrot.lane.b32.xlu0 %v1051, 3
    %v1056 = vpop.permute.xlu0 %1055
    %1057 = vrot.lane.b32.xlu0 %v1052, 3
    %v1058 = vpop.permute.xlu0 %1057
    %vm1059 = vcmp.lt.s32.totalorder %v177, 3
    %v1060 = vsel %vm1059, %v1056, %v1058
    %v1061 = vsel %vm1059, %v1058, %v1056
    %s1062 = scalar_lea.vmem [#allocation7], 37
    %v1063 = vld [vmem:[%s1062] ss:$8 sm:$0x3]
    %v1065 = vperm.slane %v1063, 0
    %v1066 = vperm.slane %v1063, 1
    %v1069 = vmul.f32 %v1065, %v1061
    %v1070 = vmul.f32 %v1066, %v1060
    %v1071 = vadd.f32 %v903, %v1069
    %v1072 = vadd.f32 %v904, %v1070
    %s1073 = sld [smem:[#allocation6 + $0x16]]
    %s1074 = sld [smem:[#allocation6 + $0x47]]
    %v1075 = vstv %s1073
    %v1076 = vmul.f32 %v1075, %v104
    %v1077 = vmul.f32 %v1075, %v105
    %v1078 = vmul.f32 %v1075, %v106
    %v1079 = vmul.f32 %v1075, %v107
    %v1080 = vstv %s1074
    %v1081 = vmul.f32 %v1080, %v125
    %v1082 = vmul.f32 %v1080, %v132
    %v1083 = vmul.f32 %v1080, %v139
    %v1084 = vmul.f32 %v1080, %v146
    %v1085 = vadd.f32 %v1076, %v1081
    %v1086 = vadd.f32 %v1077, %v1082
    %v1087 = vadd.f32 %v1078, %v1083
    %v1088 = vadd.f32 %v1079, %v1084
    %v1093 = vsel %vm167, %v1087, %v1085
    %v1094 = vsel %vm167, %v1088, %v1086
    %1097 = vrot.lane.b32.xlu0 %v1093, 2
    %v1098 = vpop.permute.xlu0 %1097
    %1099 = vrot.lane.b32.xlu0 %v1094, 2
    %v1100 = vpop.permute.xlu0 %1099
    %vm1101 = vcmp.lt.s32.totalorder %v177, 2
    %v1102 = vsel %vm1101, %v1098, %v1100
    %v1103 = vsel %vm1101, %v1100, %v1098
    %s1104 = scalar_lea.vmem [#allocation7], 38
    %v1105 = vld [vmem:[%s1104] ss:$8 sm:$0x3]
    %v1107 = vperm.slane %v1105, 0
    %v1108 = vperm.slane %v1105, 1
    %v1111 = vmul.f32 %v1107, %v1103
    %v1112 = vmul.f32 %v1108, %v1102
    %v1113 = vadd.f32 %v945, %v1111
    %v1114 = vadd.f32 %v946, %v1112
    %s1115 = sld [smem:[#allocation6 + $0x17]]
    %s1116 = sld [smem:[#allocation6 + $0x48]]
    %v1117 = vstv %s1115
    %v1118 = vmul.f32 %v1117, %v104
    %v1119 = vmul.f32 %v1117, %v105
    %v1120 = vmul.f32 %v1117, %v106
    %v1121 = vmul.f32 %v1117, %v107
    %v1122 = vstv %s1116
    %v1123 = vmul.f32 %v1122, %v125
    %v1124 = vmul.f32 %v1122, %v132
    %v1125 = vmul.f32 %v1122, %v139
    %v1126 = vmul.f32 %v1122, %v146
    %v1127 = vadd.f32 %v1118, %v1123
    %v1128 = vadd.f32 %v1119, %v1124
    %v1129 = vadd.f32 %v1120, %v1125
    %v1130 = vadd.f32 %v1121, %v1126
    %v1135 = vsel %vm167, %v1129, %v1127
    %v1136 = vsel %vm167, %v1130, %v1128
    %1139 = vrot.lane.b32.xlu0 %v1135, 1
    %v1140 = vpop.permute.xlu0 %1139
    %1141 = vrot.lane.b32.xlu0 %v1136, 1
    %v1142 = vpop.permute.xlu0 %1141
    %vm1143 = vcmp.lt.s32.totalorder %v177, 1
    %v1144 = vsel %vm1143, %v1140, %v1142
    %v1145 = vsel %vm1143, %v1142, %v1140
    %s1146 = scalar_lea.vmem [#allocation7], 39
    %v1147 = vld [vmem:[%s1146] ss:$8 sm:$0x3]
    %v1149 = vperm.slane %v1147, 0
    %v1150 = vperm.slane %v1147, 1
    %v1153 = vmul.f32 %v1149, %v1145
    %v1154 = vmul.f32 %v1150, %v1144
    %v1155 = vadd.f32 %v987, %v1153
    %v1156 = vadd.f32 %v988, %v1154
    %s1157 = sld [smem:[#allocation6 + $0x18]]
    %s1158 = sld [smem:[#allocation6 + $0x49]]
    %v1159 = vstv %s1157
    %v1160 = vmul.f32 %v1159, %v104
    %v1161 = vmul.f32 %v1159, %v105
    %v1162 = vmul.f32 %v1159, %v106
    %v1163 = vmul.f32 %v1159, %v107
    %v1164 = vstv %s1158
    %v1165 = vmul.f32 %v1164, %v125
    %v1166 = vmul.f32 %v1164, %v132
    %v1167 = vmul.f32 %v1164, %v139
    %v1168 = vmul.f32 %v1164, %v146
    %v1169 = vadd.f32 %v1160, %v1165
    %v1170 = vadd.f32 %v1161, %v1166
    %v1171 = vadd.f32 %v1162, %v1167
    %v1172 = vadd.f32 %v1163, %v1168
    %s1173 = scalar_lea.vmem [#allocation7], 48
    %v1174 = vld [vmem:[%s1173] ss:$8 sm:$0x3]
    %v1176 = vperm.slane %v1174, 0
    %v1177 = vperm.slane %v1174, 1
    %v1184 = vsel %vm167, %v1171, %v1169
    %v1185 = vsel %vm167, %v1172, %v1170
    %v1188 = vmul.f32 %v1176, %v1184
    %v1189 = vmul.f32 %v1177, %v1185
    %v1190 = vadd.f32 %v1029, %v1188
    %v1191 = vadd.f32 %v1030, %v1189
    %s1192 = sld [smem:[#allocation6 + $0x19]]
    %s1193 = sld [smem:[#allocation6 + $0x4a]]
    %v1194 = vstv %s1192
    %v1195 = vmul.f32 %v1194, %v104
    %v1196 = vmul.f32 %v1194, %v105
    %v1197 = vmul.f32 %v1194, %v106
    %v1198 = vmul.f32 %v1194, %v107
    %v1199 = vstv %s1193
    %v1200 = vmul.f32 %v1199, %v125
    %v1201 = vmul.f32 %v1199, %v132
    %v1202 = vmul.f32 %v1199, %v139
    %v1203 = vmul.f32 %v1199, %v146
    %v1204 = vadd.f32 %v1195, %v1200
    %v1205 = vadd.f32 %v1196, %v1201
    %v1206 = vadd.f32 %v1197, %v1202
    %v1207 = vadd.f32 %v1198, %v1203
    %v1212 = vsel %vm167, %v1206, %v1204
    %v1213 = vsel %vm167, %v1207, %v1205
    %1216 = vrot.lane.b32.xlu0 %v1212, 127
    %v1217 = vpop.permute.xlu0 %1216
    %1218 = vrot.lane.b32.xlu0 %v1213, 127
    %v1219 = vpop.permute.xlu0 %1218
    %vm1220 = vcmp.lt.s32.totalorder %v177, 127
    %v1221 = vsel %vm1220, %v1217, %v1219
    %v1222 = vsel %vm1220, %v1219, %v1217
    %s1223 = scalar_lea.vmem [#allocation7], 49
    %v1224 = vld [vmem:[%s1223] ss:$8 sm:$0x3]
    %v1226 = vperm.slane %v1224, 0
    %v1227 = vperm.slane %v1224, 1
    %v1230 = vmul.f32 %v1226, %v1221
    %v1231 = vmul.f32 %v1227, %v1222
    %v1232 = vadd.f32 %v1071, %v1230
    %v1233 = vadd.f32 %v1072, %v1231
    %s1234 = sld [smem:[#allocation6 + $0x1a]]
    %s1235 = sld [smem:[#allocation6 + $0x4b]]
    %v1236 = vstv %s1234
    %v1237 = vmul.f32 %v1236, %v104
    %v1238 = vmul.f32 %v1236, %v105
    %v1239 = vmul.f32 %v1236, %v106
    %v1240 = vmul.f32 %v1236, %v107
    %v1241 = vstv %s1235
    %v1242 = vmul.f32 %v1241, %v125
    %v1243 = vmul.f32 %v1241, %v132
    %v1244 = vmul.f32 %v1241, %v139
    %v1245 = vmul.f32 %v1241, %v146
    %v1246 = vadd.f32 %v1237, %v1242
    %v1247 = vadd.f32 %v1238, %v1243
    %v1248 = vadd.f32 %v1239, %v1244
    %v1249 = vadd.f32 %v1240, %v1245
    %v1254 = vsel %vm167, %v1248, %v1246
    %v1255 = vsel %vm167, %v1249, %v1247
    %1258 = vrot.lane.b32.xlu0 %v1254, 126
    %v1259 = vpop.permute.xlu0 %1258
    %1260 = vrot.lane.b32.xlu0 %v1255, 126
    %v1261 = vpop.permute.xlu0 %1260
    %vm1262 = vcmp.lt.s32.totalorder %v177, 126
    %v1263 = vsel %vm1262, %v1259, %v1261
    %v1264 = vsel %vm1262, %v1261, %v1259
    %s1265 = scalar_lea.vmem [#allocation7], 50
    %v1266 = vld [vmem:[%s1265] ss:$8 sm:$0x3]
    %v1268 = vperm.slane %v1266, 0
    %v1269 = vperm.slane %v1266, 1
    %v1272 = vmul.f32 %v1268, %v1263
    %v1273 = vmul.f32 %v1269, %v1264
    %v1274 = vadd.f32 %v1113, %v1272
    %v1275 = vadd.f32 %v1114, %v1273
    %s1276 = sld [smem:[#allocation6 + $0x1b]]
    %s1277 = sld [smem:[#allocation6 + $0x4c]]
    %v1278 = vstv %s1276
    %v1279 = vmul.f32 %v1278, %v104
    %v1280 = vmul.f32 %v1278, %v105
    %v1281 = vmul.f32 %v1278, %v106
    %v1282 = vmul.f32 %v1278, %v107
    %v1283 = vstv %s1277
    %v1284 = vmul.f32 %v1283, %v125
    %v1285 = vmul.f32 %v1283, %v132
    %v1286 = vmul.f32 %v1283, %v139
    %v1287 = vmul.f32 %v1283, %v146
    %v1288 = vadd.f32 %v1279, %v1284
    %v1289 = vadd.f32 %v1280, %v1285
    %v1290 = vadd.f32 %v1281, %v1286
    %v1291 = vadd.f32 %v1282, %v1287
    %v1296 = vsel %vm167, %v1290, %v1288
    %v1297 = vsel %vm167, %v1291, %v1289
    %1300 = vrot.lane.b32.xlu0 %v1296, 125
    %v1301 = vpop.permute.xlu0 %1300
    %1302 = vrot.lane.b32.xlu0 %v1297, 125
    %v1303 = vpop.permute.xlu0 %1302
    %vm1304 = vcmp.lt.s32.totalorder %v177, 125
    %v1305 = vsel %vm1304, %v1301, %v1303
    %v1306 = vsel %vm1304, %v1303, %v1301
    %s1307 = scalar_lea.vmem [#allocation7], 51
    %v1308 = vld [vmem:[%s1307] ss:$8 sm:$0x3]
    %v1310 = vperm.slane %v1308, 0
    %v1311 = vperm.slane %v1308, 1
    %v1314 = vmul.f32 %v1310, %v1305
    %v1315 = vmul.f32 %v1311, %v1306
    %v1316 = vadd.f32 %v1155, %v1314
    %v1317 = vadd.f32 %v1156, %v1315
    %s1318 = sld [smem:[#allocation6 + $0x1c]]
    %s1319 = sld [smem:[#allocation6 + $0x4d]]
    %v1320 = vstv %s1318
    %v1321 = vmul.f32 %v1320, %v104
    %v1322 = vmul.f32 %v1320, %v105
    %v1323 = vmul.f32 %v1320, %v106
    %v1324 = vmul.f32 %v1320, %v107
    %v1325 = vstv %s1319
    %v1326 = vmul.f32 %v1325, %v125
    %v1327 = vmul.f32 %v1325, %v132
    %v1328 = vmul.f32 %v1325, %v139
    %v1329 = vmul.f32 %v1325, %v146
    %v1330 = vadd.f32 %v1321, %v1326
    %v1331 = vadd.f32 %v1322, %v1327
    %v1332 = vadd.f32 %v1323, %v1328
    %v1333 = vadd.f32 %v1324, %v1329
    %v1338 = vsel %vm167, %v1332, %v1330
    %v1339 = vsel %vm167, %v1333, %v1331
    %1342 = vrot.lane.b32.xlu0 %v1338, 115
    %v1343 = vpop.permute.xlu0 %1342
    %1344 = vrot.lane.b32.xlu0 %v1339, 115
    %v1345 = vpop.permute.xlu0 %1344
    %vm1346 = vcmp.lt.s32.totalorder %v177, 115
    %v1347 = vsel %vm1346, %v1343, %v1345
    %v1348 = vsel %vm1346, %v1345, %v1343
    %s1349 = scalar_lea.vmem [#allocation7], 52
    %v1350 = vld [vmem:[%s1349] ss:$8 sm:$0x3]
    %v1352 = vperm.slane %v1350, 0
    %v1353 = vperm.slane %v1350, 1
    %v1356 = vmul.f32 %v1352, %v1347
    %v1357 = vmul.f32 %v1353, %v1348
    %v1358 = vadd.f32 %v1190, %v1356
    %v1359 = vadd.f32 %v1191, %v1357
    %s1360 = sld [smem:[#allocation6 + $0x1d]]
    %s1361 = sld [smem:[#allocation6 + $0x4e]]
    %v1362 = vstv %s1360
    %v1363 = vmul.f32 %v1362, %v104
    %v1364 = vmul.f32 %v1362, %v105
    %v1365 = vmul.f32 %v1362, %v106
    %v1366 = vmul.f32 %v1362, %v107
    %v1367 = vstv %s1361
    %v1368 = vmul.f32 %v1367, %v125
    %v1369 = vmul.f32 %v1367, %v132
    %v1370 = vmul.f32 %v1367, %v139
    %v1371 = vmul.f32 %v1367, %v146
    %v1372 = vadd.f32 %v1363, %v1368
    %v1373 = vadd.f32 %v1364, %v1369
    %v1374 = vadd.f32 %v1365, %v1370
    %v1375 = vadd.f32 %v1366, %v1371
    %v1380 = vsel %vm167, %v1374, %v1372
    %v1381 = vsel %vm167, %v1375, %v1373
    %1384 = vrot.lane.b32.xlu0 %v1380, 114
    %v1385 = vpop.permute.xlu0 %1384
    %1386 = vrot.lane.b32.xlu0 %v1381, 114
    %v1387 = vpop.permute.xlu0 %1386
    %vm1388 = vcmp.lt.s32.totalorder %v177, 114
    %v1389 = vsel %vm1388, %v1385, %v1387
    %v1390 = vsel %vm1388, %v1387, %v1385
    %s1391 = scalar_lea.vmem [#allocation7], 53
    %v1392 = vld [vmem:[%s1391] ss:$8 sm:$0x3]
    %v1394 = vperm.slane %v1392, 0
    %v1395 = vperm.slane %v1392, 1
    %v1398 = vmul.f32 %v1394, %v1389
    %v1399 = vmul.f32 %v1395, %v1390
    %v1400 = vadd.f32 %v1232, %v1398
    %v1401 = vadd.f32 %v1233, %v1399
    %s1402 = sld [smem:[#allocation6 + $0x1e]]
    %s1403 = sld [smem:[#allocation6 + $0x4f]]
    %v1404 = vstv %s1402
    %v1405 = vmul.f32 %v1404, %v104
    %v1406 = vmul.f32 %v1404, %v105
    %v1407 = vmul.f32 %v1404, %v106
    %v1408 = vmul.f32 %v1404, %v107
    %v1409 = vstv %s1403
    %v1410 = vmul.f32 %v1409, %v125
    %v1411 = vmul.f32 %v1409, %v132
    %v1412 = vmul.f32 %v1409, %v139
    %v1413 = vmul.f32 %v1409, %v146
    %v1414 = vadd.f32 %v1405, %v1410
    %v1415 = vadd.f32 %v1406, %v1411
    %v1416 = vadd.f32 %v1407, %v1412
    %v1417 = vadd.f32 %v1408, %v1413
    %v1422 = vsel %vm167, %v1416, %v1414
    %v1423 = vsel %vm167, %v1417, %v1415
    %1426 = vrot.lane.b32.xlu0 %v1422, 113
    %v1427 = vpop.permute.xlu0 %1426
    %1428 = vrot.lane.b32.xlu0 %v1423, 113
    %v1429 = vpop.permute.xlu0 %1428
    %vm1430 = vcmp.lt.s32.totalorder %v177, 113
    %v1431 = vsel %vm1430, %v1427, %v1429
    %v1432 = vsel %vm1430, %v1429, %v1427
    %s1433 = scalar_lea.vmem [#allocation7], 54
    %v1434 = vld [vmem:[%s1433] ss:$8 sm:$0x3]
    %v1436 = vperm.slane %v1434, 0
    %v1437 = vperm.slane %v1434, 1
    %v1440 = vmul.f32 %v1436, %v1431
    %v1441 = vmul.f32 %v1437, %v1432
    %v1442 = vadd.f32 %v1274, %v1440
    %v1443 = vadd.f32 %v1275, %v1441
    %s1444 = sld [smem:[#allocation6 + $0x1f]]
    %s1445 = sld [smem:[#allocation6 + $0x50]]
    %v1446 = vstv %s1444
    %v1447 = vmul.f32 %v1446, %v104
    %v1448 = vmul.f32 %v1446, %v105
    %v1449 = vmul.f32 %v1446, %v106
    %v1450 = vmul.f32 %v1446, %v107
    %v1451 = vstv %s1445
    %v1452 = vmul.f32 %v1451, %v125
    %v1453 = vmul.f32 %v1451, %v132
    %v1454 = vmul.f32 %v1451, %v139
    %v1455 = vmul.f32 %v1451, %v146
    %v1456 = vadd.f32 %v1447, %v1452
    %v1457 = vadd.f32 %v1448, %v1453
    %v1458 = vadd.f32 %v1449, %v1454
    %v1459 = vadd.f32 %v1450, %v1455
    %v1464 = vsel %vm167, %v1458, %v1456
    %v1465 = vsel %vm167, %v1459, %v1457
    %1468 = vrot.lane.b32.xlu0 %v1464, 112
    %v1469 = vpop.permute.xlu0 %1468
    %1470 = vrot.lane.b32.xlu0 %v1465, 112
    %v1471 = vpop.permute.xlu0 %1470
    %vm1472 = vcmp.lt.s32.totalorder %v177, 112
    %v1473 = vsel %vm1472, %v1469, %v1471
    %v1474 = vsel %vm1472, %v1471, %v1469
    %s1475 = scalar_lea.vmem [#allocation7], 55
    %v1476 = vld [vmem:[%s1475] ss:$8 sm:$0x3]
    %v1478 = vperm.slane %v1476, 0
    %v1479 = vperm.slane %v1476, 1
    %v1482 = vmul.f32 %v1478, %v1473
    %v1483 = vmul.f32 %v1479, %v1474
    %v1484 = vadd.f32 %v1316, %v1482
    %v1485 = vadd.f32 %v1317, %v1483
    %s1486 = sld [smem:[#allocation6 + $0x20]]
    %s1487 = sld [smem:[#allocation6 + $0x51]]
    %v1488 = vstv %s1486
    %v1489 = vmul.f32 %v1488, %v104
    %v1490 = vmul.f32 %v1488, %v105
    %v1491 = vmul.f32 %v1488, %v106
    %v1492 = vmul.f32 %v1488, %v107
    %v1493 = vstv %s1487
    %v1494 = vmul.f32 %v1493, %v125
    %v1495 = vmul.f32 %v1493, %v132
    %v1496 = vmul.f32 %v1493, %v139
    %v1497 = vmul.f32 %v1493, %v146
    %v1498 = vadd.f32 %v1489, %v1494
    %v1499 = vadd.f32 %v1490, %v1495
    %v1500 = vadd.f32 %v1491, %v1496
    %v1501 = vadd.f32 %v1492, %v1497
    %v1506 = vsel %vm167, %v1500, %v1498
    %v1507 = vsel %vm167, %v1501, %v1499
    %1510 = vrot.lane.b32.xlu0 %v1506, 111
    %v1511 = vpop.permute.xlu0 %1510
    %1512 = vrot.lane.b32.xlu0 %v1507, 111
    %v1513 = vpop.permute.xlu0 %1512
    %vm1514 = vcmp.lt.s32.totalorder %v177, 111
    %v1515 = vsel %vm1514, %v1511, %v1513
    %v1516 = vsel %vm1514, %v1513, %v1511
    %s1517 = scalar_lea.vmem [#allocation7], 64
    %v1518 = vld [vmem:[%s1517] ss:$8 sm:$0x3]
    %v1520 = vperm.slane %v1518, 0
    %v1521 = vperm.slane %v1518, 1
    %v1524 = vmul.f32 %v1520, %v1515
    %v1525 = vmul.f32 %v1521, %v1516
    %v1526 = vadd.f32 %v1358, %v1524
    %v1527 = vadd.f32 %v1359, %v1525
    %s1528 = sld [smem:[#allocation6 + $0x21]]
    %s1529 = sld [smem:[#allocation6 + $0x52]]
    %v1530 = vstv %s1528
    %v1531 = vmul.f32 %v1530, %v104
    %v1532 = vmul.f32 %v1530, %v105
    %v1533 = vmul.f32 %v1530, %v106
    %v1534 = vmul.f32 %v1530, %v107
    %v1535 = vstv %s1529
    %v1536 = vmul.f32 %v1535, %v125
    %v1537 = vmul.f32 %v1535, %v132
    %v1538 = vmul.f32 %v1535, %v139
    %v1539 = vmul.f32 %v1535, %v146
    %v1540 = vadd.f32 %v1531, %v1536
    %v1541 = vadd.f32 %v1532, %v1537
    %v1542 = vadd.f32 %v1533, %v1538
    %v1543 = vadd.f32 %v1534, %v1539
    %v1548 = vsel %vm167, %v1542, %v1540
    %v1549 = vsel %vm167, %v1543, %v1541
    %1552 = vrot.lane.b32.xlu0 %v1548, 110
    %v1553 = vpop.permute.xlu0 %1552
    %1554 = vrot.lane.b32.xlu0 %v1549, 110
    %v1555 = vpop.permute.xlu0 %1554
    %vm1556 = vcmp.lt.s32.totalorder %v177, 110
    %v1557 = vsel %vm1556, %v1553, %v1555
    %v1558 = vsel %vm1556, %v1555, %v1553
    %s1559 = scalar_lea.vmem [#allocation7], 65
    %v1560 = vld [vmem:[%s1559] ss:$8 sm:$0x3]
    %v1562 = vperm.slane %v1560, 0
    %v1563 = vperm.slane %v1560, 1
    %v1566 = vmul.f32 %v1562, %v1557
    %v1567 = vmul.f32 %v1563, %v1558
    %v1568 = vadd.f32 %v1400, %v1566
    %v1569 = vadd.f32 %v1401, %v1567
    %s1570 = sld [smem:[#allocation6 + $0x22]]
    %s1571 = sld [smem:[#allocation6 + $0x53]]
    %v1572 = vstv %s1570
    %v1573 = vmul.f32 %v1572, %v104
    %v1574 = vmul.f32 %v1572, %v105
    %v1575 = vmul.f32 %v1572, %v106
    %v1576 = vmul.f32 %v1572, %v107
    %v1577 = vstv %s1571
    %v1578 = vmul.f32 %v1577, %v125
    %v1579 = vmul.f32 %v1577, %v132
    %v1580 = vmul.f32 %v1577, %v139
    %v1581 = vmul.f32 %v1577, %v146
    %v1582 = vadd.f32 %v1573, %v1578
    %v1583 = vadd.f32 %v1574, %v1579
    %v1584 = vadd.f32 %v1575, %v1580
    %v1585 = vadd.f32 %v1576, %v1581
    %v1590 = vsel %vm167, %v1584, %v1582
    %v1591 = vsel %vm167, %v1585, %v1583
    %1594 = vrot.lane.b32.xlu0 %v1590, 109
    %v1595 = vpop.permute.xlu0 %1594
    %1596 = vrot.lane.b32.xlu0 %v1591, 109
    %v1597 = vpop.permute.xlu0 %1596
    %vm1598 = vcmp.lt.s32.totalorder %v177, 109
    %v1599 = vsel %vm1598, %v1595, %v1597
    %v1600 = vsel %vm1598, %v1597, %v1595
    %s1601 = scalar_lea.vmem [#allocation7], 66
    %v1602 = vld [vmem:[%s1601] ss:$8 sm:$0x3]
    %v1604 = vperm.slane %v1602, 0
    %v1605 = vperm.slane %v1602, 1
    %v1608 = vmul.f32 %v1604, %v1599
    %v1609 = vmul.f32 %v1605, %v1600
    %v1610 = vadd.f32 %v1442, %v1608
    %v1611 = vadd.f32 %v1443, %v1609
    %s1612 = sld [smem:[#allocation6 + $0x23]]
    %s1613 = sld [smem:[#allocation6 + $0x54]]
    %v1614 = vstv %s1612
    %v1615 = vmul.f32 %v1614, %v104
    %v1616 = vmul.f32 %v1614, %v105
    %v1617 = vmul.f32 %v1614, %v106
    %v1618 = vmul.f32 %v1614, %v107
    %v1619 = vstv %s1613
    %v1620 = vmul.f32 %v1619, %v125
    %v1621 = vmul.f32 %v1619, %v132
    %v1622 = vmul.f32 %v1619, %v139
    %v1623 = vmul.f32 %v1619, %v146
    %v1624 = vadd.f32 %v1615, %v1620
    %v1625 = vadd.f32 %v1616, %v1621
    %v1626 = vadd.f32 %v1617, %v1622
    %v1627 = vadd.f32 %v1618, %v1623
    %v1632 = vsel %vm167, %v1626, %v1624
    %v1633 = vsel %vm167, %v1627, %v1625
    %1636 = vrot.lane.b32.xlu0 %v1632, 99
    %v1637 = vpop.permute.xlu0 %1636
    %1638 = vrot.lane.b32.xlu0 %v1633, 99
    %v1639 = vpop.permute.xlu0 %1638
    %vm1640 = vcmp.lt.s32.totalorder %v177, 99
    %v1641 = vsel %vm1640, %v1637, %v1639
    %v1642 = vsel %vm1640, %v1639, %v1637
    %s1643 = scalar_lea.vmem [#allocation7], 67
    %v1644 = vld [vmem:[%s1643] ss:$8 sm:$0x3]
    %v1646 = vperm.slane %v1644, 0
    %v1647 = vperm.slane %v1644, 1
    %v1650 = vmul.f32 %v1646, %v1641
    %v1651 = vmul.f32 %v1647, %v1642
    %v1652 = vadd.f32 %v1484, %v1650
    %v1653 = vadd.f32 %v1485, %v1651
    %s1654 = sld [smem:[#allocation6 + $0x24]]
    %s1655 = sld [smem:[#allocation6 + $0x55]]
    %v1656 = vstv %s1654
    %v1657 = vmul.f32 %v1656, %v104
    %v1658 = vmul.f32 %v1656, %v105
    %v1659 = vmul.f32 %v1656, %v106
    %v1660 = vmul.f32 %v1656, %v107
    %v1661 = vstv %s1655
    %v1662 = vmul.f32 %v1661, %v125
    %v1663 = vmul.f32 %v1661, %v132
    %v1664 = vmul.f32 %v1661, %v139
    %v1665 = vmul.f32 %v1661, %v146
    %v1666 = vadd.f32 %v1657, %v1662
    %v1667 = vadd.f32 %v1658, %v1663
    %v1668 = vadd.f32 %v1659, %v1664
    %v1669 = vadd.f32 %v1660, %v1665
    %v1674 = vsel %vm167, %v1668, %v1666
    %v1675 = vsel %vm167, %v1669, %v1667
    %1678 = vrot.lane.b32.xlu0 %v1674, 98
    %v1679 = vpop.permute.xlu0 %1678
    %1680 = vrot.lane.b32.xlu0 %v1675, 98
    %v1681 = vpop.permute.xlu0 %1680
    %vm1682 = vcmp.lt.s32.totalorder %v177, 98
    %v1683 = vsel %vm1682, %v1679, %v1681
    %v1684 = vsel %vm1682, %v1681, %v1679
    %s1685 = scalar_lea.vmem [#allocation7], 68
    %v1686 = vld [vmem:[%s1685] ss:$8 sm:$0x3]
    %v1688 = vperm.slane %v1686, 0
    %v1689 = vperm.slane %v1686, 1
    %v1692 = vmul.f32 %v1688, %v1683
    %v1693 = vmul.f32 %v1689, %v1684
    %v1694 = vadd.f32 %v1526, %v1692
    %v1695 = vadd.f32 %v1527, %v1693
    %s1696 = sld [smem:[#allocation6 + $0x25]]
    %s1697 = sld [smem:[#allocation6 + $0x56]]
    %v1698 = vstv %s1696
    %v1699 = vmul.f32 %v1698, %v104
    %v1700 = vmul.f32 %v1698, %v105
    %v1701 = vmul.f32 %v1698, %v106
    %v1702 = vmul.f32 %v1698, %v107
    %v1703 = vstv %s1697
    %v1704 = vmul.f32 %v1703, %v125
    %v1705 = vmul.f32 %v1703, %v132
    %v1706 = vmul.f32 %v1703, %v139
    %v1707 = vmul.f32 %v1703, %v146
    %v1708 = vadd.f32 %v1699, %v1704
    %v1709 = vadd.f32 %v1700, %v1705
    %v1710 = vadd.f32 %v1701, %v1706
    %v1711 = vadd.f32 %v1702, %v1707
    %v1716 = vsel %vm167, %v1710, %v1708
    %v1717 = vsel %vm167, %v1711, %v1709
    %1720 = vrot.lane.b32.xlu0 %v1716, 97
    %v1721 = vpop.permute.xlu0 %1720
    %1722 = vrot.lane.b32.xlu0 %v1717, 97
    %v1723 = vpop.permute.xlu0 %1722
    %vm1724 = vcmp.lt.s32.totalorder %v177, 97
    %v1725 = vsel %vm1724, %v1721, %v1723
    %v1726 = vsel %vm1724, %v1723, %v1721
    %s1727 = scalar_lea.vmem [#allocation7], 69
    %v1728 = vld [vmem:[%s1727] ss:$8 sm:$0x3]
    %v1730 = vperm.slane %v1728, 0
    %v1731 = vperm.slane %v1728, 1
    %v1734 = vmul.f32 %v1730, %v1725
    %v1735 = vmul.f32 %v1731, %v1726
    %v1736 = vadd.f32 %v1568, %v1734
    %v1737 = vadd.f32 %v1569, %v1735
    %s1738 = sld [smem:[#allocation6 + $0x26]]
    %s1739 = sld [smem:[#allocation6 + $0x57]]
    %v1740 = vstv %s1738
    %v1741 = vmul.f32 %v1740, %v104
    %v1742 = vmul.f32 %v1740, %v105
    %v1743 = vmul.f32 %v1740, %v106
    %v1744 = vmul.f32 %v1740, %v107
    %v1745 = vstv %s1739
    %v1746 = vmul.f32 %v1745, %v125
    %v1747 = vmul.f32 %v1745, %v132
    %v1748 = vmul.f32 %v1745, %v139
    %v1749 = vmul.f32 %v1745, %v146
    %v1750 = vadd.f32 %v1741, %v1746
    %v1751 = vadd.f32 %v1742, %v1747
    %v1752 = vadd.f32 %v1743, %v1748
    %v1753 = vadd.f32 %v1744, %v1749
    %v1758 = vsel %vm167, %v1752, %v1750
    %v1759 = vsel %vm167, %v1753, %v1751
    %1762 = vrot.lane.b32.xlu0 %v1758, 96
    %v1763 = vpop.permute.xlu0 %1762
    %1764 = vrot.lane.b32.xlu0 %v1759, 96
    %v1765 = vpop.permute.xlu0 %1764
    %vm1766 = vcmp.lt.s32.totalorder %v177, 96
    %v1767 = vsel %vm1766, %v1763, %v1765
    %v1768 = vsel %vm1766, %v1765, %v1763
    %s1769 = scalar_lea.vmem [#allocation7], 70
    %v1770 = vld [vmem:[%s1769] ss:$8 sm:$0x3]
    %v1772 = vperm.slane %v1770, 0
    %v1773 = vperm.slane %v1770, 1
    %v1776 = vmul.f32 %v1772, %v1767
    %v1777 = vmul.f32 %v1773, %v1768
    %v1778 = vadd.f32 %v1610, %v1776
    %v1779 = vadd.f32 %v1611, %v1777
    %s1780 = sld [smem:[#allocation6 + $0x27]]
    %s1781 = sld [smem:[#allocation6 + $0x58]]
    %v1782 = vstv %s1780
    %v1783 = vmul.f32 %v1782, %v104
    %v1784 = vmul.f32 %v1782, %v105
    %v1785 = vmul.f32 %v1782, %v106
    %v1786 = vmul.f32 %v1782, %v107
    %v1787 = vstv %s1781
    %v1788 = vmul.f32 %v1787, %v125
    %v1789 = vmul.f32 %v1787, %v132
    %v1790 = vmul.f32 %v1787, %v139
    %v1791 = vmul.f32 %v1787, %v146
    %v1792 = vadd.f32 %v1783, %v1788
    %v1793 = vadd.f32 %v1784, %v1789
    %v1794 = vadd.f32 %v1785, %v1790
    %v1795 = vadd.f32 %v1786, %v1791
    %v1800 = vsel %vm167, %v1794, %v1792
    %v1801 = vsel %vm167, %v1795, %v1793
    %1804 = vrot.lane.b32.xlu0 %v1800, 95
    %v1805 = vpop.permute.xlu0 %1804
    %1806 = vrot.lane.b32.xlu0 %v1801, 95
    %v1807 = vpop.permute.xlu0 %1806
    %vm1808 = vcmp.lt.s32.totalorder %v177, 95
    %v1809 = vsel %vm1808, %v1805, %v1807
    %v1810 = vsel %vm1808, %v1807, %v1805
    %s1811 = scalar_lea.vmem [#allocation7], 71
    %v1812 = vld [vmem:[%s1811] ss:$8 sm:$0x3]
    %v1814 = vperm.slane %v1812, 0
    %v1815 = vperm.slane %v1812, 1
    %v1818 = vmul.f32 %v1814, %v1809
    %v1819 = vmul.f32 %v1815, %v1810
    %v1820 = vadd.f32 %v1652, %v1818
    %v1821 = vadd.f32 %v1653, %v1819
    %s1822 = sld [smem:[#allocation6 + $0x28]]
    %s1823 = sld [smem:[#allocation6 + $0x59]]
    %v1824 = vstv %s1822
    %v1825 = vmul.f32 %v1824, %v104
    %v1826 = vmul.f32 %v1824, %v105
    %v1827 = vmul.f32 %v1824, %v106
    %v1828 = vmul.f32 %v1824, %v107
    %v1829 = vstv %s1823
    %v1830 = vmul.f32 %v1829, %v125
    %v1831 = vmul.f32 %v1829, %v132
    %v1832 = vmul.f32 %v1829, %v139
    %v1833 = vmul.f32 %v1829, %v146
    %v1834 = vadd.f32 %v1825, %v1830
    %v1835 = vadd.f32 %v1826, %v1831
    %v1836 = vadd.f32 %v1827, %v1832
    %v1837 = vadd.f32 %v1828, %v1833
    %v1842 = vsel %vm167, %v1836, %v1834
    %v1843 = vsel %vm167, %v1837, %v1835
    %1846 = vrot.lane.b32.xlu0 %v1842, 94
    %v1847 = vpop.permute.xlu0 %1846
    %1848 = vrot.lane.b32.xlu0 %v1843, 94
    %v1849 = vpop.permute.xlu0 %1848
    %vm1850 = vcmp.lt.s32.totalorder %v177, 94
    %v1851 = vsel %vm1850, %v1847, %v1849
    %v1852 = vsel %vm1850, %v1849, %v1847
    %s1853 = scalar_lea.vmem [#allocation7], 80
    %v1854 = vld [vmem:[%s1853] ss:$8 sm:$0x3]
    %v1856 = vperm.slane %v1854, 0
    %v1857 = vperm.slane %v1854, 1
    %v1860 = vmul.f32 %v1856, %v1851
    %v1861 = vmul.f32 %v1857, %v1852
    %v1862 = vadd.f32 %v1694, %v1860
    %v1863 = vadd.f32 %v1695, %v1861
    %s1864 = sld [smem:[#allocation6 + $0x29]]
    %s1865 = sld [smem:[#allocation6 + $0x5a]]
    %v1866 = vstv %s1864
    %v1867 = vmul.f32 %v1866, %v104
    %v1868 = vmul.f32 %v1866, %v105
    %v1869 = vmul.f32 %v1866, %v106
    %v1870 = vmul.f32 %v1866, %v107
    %v1871 = vstv %s1865
    %v1872 = vmul.f32 %v1871, %v125
    %v1873 = vmul.f32 %v1871, %v132
    %v1874 = vmul.f32 %v1871, %v139
    %v1875 = vmul.f32 %v1871, %v146
    %v1876 = vadd.f32 %v1867, %v1872
    %v1877 = vadd.f32 %v1868, %v1873
    %v1878 = vadd.f32 %v1869, %v1874
    %v1879 = vadd.f32 %v1870, %v1875
    %v1884 = vsel %vm167, %v1878, %v1876
    %v1885 = vsel %vm167, %v1879, %v1877
    %1888 = vrot.lane.b32.xlu0 %v1884, 93
    %v1889 = vpop.permute.xlu0 %1888
    %1890 = vrot.lane.b32.xlu0 %v1885, 93
    %v1891 = vpop.permute.xlu0 %1890
    %vm1892 = vcmp.lt.s32.totalorder %v177, 93
    %v1893 = vsel %vm1892, %v1889, %v1891
    %v1894 = vsel %vm1892, %v1891, %v1889
    %s1895 = scalar_lea.vmem [#allocation7], 81
    %v1896 = vld [vmem:[%s1895] ss:$8 sm:$0x3]
    %v1898 = vperm.slane %v1896, 0
    %v1899 = vperm.slane %v1896, 1
    %v1902 = vmul.f32 %v1898, %v1893
    %v1903 = vmul.f32 %v1899, %v1894
    %v1904 = vadd.f32 %v1736, %v1902
    %v1905 = vadd.f32 %v1737, %v1903
    %s1906 = sld [smem:[#allocation6 + $0x2a]]
    %s1907 = sld [smem:[#allocation6 + $0x5b]]
    %v1908 = vstv %s1906
    %v1909 = vmul.f32 %v1908, %v104
    %v1910 = vmul.f32 %v1908, %v105
    %v1911 = vmul.f32 %v1908, %v106
    %v1912 = vmul.f32 %v1908, %v107
    %v1913 = vstv %s1907
    %v1914 = vmul.f32 %v1913, %v125
    %v1915 = vmul.f32 %v1913, %v132
    %v1916 = vmul.f32 %v1913, %v139
    %v1917 = vmul.f32 %v1913, %v146
    %v1918 = vadd.f32 %v1909, %v1914
    %v1919 = vadd.f32 %v1910, %v1915
    %v1920 = vadd.f32 %v1911, %v1916
    %v1921 = vadd.f32 %v1912, %v1917
    %v1926 = vsel %vm167, %v1920, %v1918
    %v1927 = vsel %vm167, %v1921, %v1919
    %1930 = vrot.lane.b32.xlu0 %v1926, 83
    %v1931 = vpop.permute.xlu0 %1930
    %1932 = vrot.lane.b32.xlu0 %v1927, 83
    %v1933 = vpop.permute.xlu0 %1932
    %vm1934 = vcmp.lt.s32.totalorder %v177, 83
    %v1935 = vsel %vm1934, %v1931, %v1933
    %v1936 = vsel %vm1934, %v1933, %v1931
    %s1937 = scalar_lea.vmem [#allocation7], 82
    %v1938 = vld [vmem:[%s1937] ss:$8 sm:$0x3]
    %v1940 = vperm.slane %v1938, 0
    %v1941 = vperm.slane %v1938, 1
    %v1944 = vmul.f32 %v1940, %v1935
    %v1945 = vmul.f32 %v1941, %v1936
    %v1946 = vadd.f32 %v1778, %v1944
    %v1947 = vadd.f32 %v1779, %v1945
    %s1948 = sld [smem:[#allocation6 + $0x2b]]
    %s1949 = sld [smem:[#allocation6 + $0x5c]]
    %v1950 = vstv %s1948
    %v1951 = vmul.f32 %v1950, %v104
    %v1952 = vmul.f32 %v1950, %v105
    %v1953 = vmul.f32 %v1950, %v106
    %v1954 = vmul.f32 %v1950, %v107
    %v1955 = vstv %s1949
    %v1956 = vmul.f32 %v1955, %v125
    %v1957 = vmul.f32 %v1955, %v132
    %v1958 = vmul.f32 %v1955, %v139
    %v1959 = vmul.f32 %v1955, %v146
    %v1960 = vadd.f32 %v1951, %v1956
    %v1961 = vadd.f32 %v1952, %v1957
    %v1962 = vadd.f32 %v1953, %v1958
    %v1963 = vadd.f32 %v1954, %v1959
    %v1968 = vsel %vm167, %v1962, %v1960
    %v1969 = vsel %vm167, %v1963, %v1961
    %1972 = vrot.lane.b32.xlu0 %v1968, 82
    %v1973 = vpop.permute.xlu0 %1972
    %1974 = vrot.lane.b32.xlu0 %v1969, 82
    %v1975 = vpop.permute.xlu0 %1974
    %vm1976 = vcmp.lt.s32.totalorder %v177, 82
    %v1977 = vsel %vm1976, %v1973, %v1975
    %v1978 = vsel %vm1976, %v1975, %v1973
    %s1979 = scalar_lea.vmem [#allocation7], 83
    %v1980 = vld [vmem:[%s1979] ss:$8 sm:$0x3]
    %v1982 = vperm.slane %v1980, 0
    %v1983 = vperm.slane %v1980, 1
    %v1986 = vmul.f32 %v1982, %v1977
    %v1987 = vmul.f32 %v1983, %v1978
    %v1988 = vadd.f32 %v1820, %v1986
    %v1989 = vadd.f32 %v1821, %v1987
    %s1990 = sld [smem:[#allocation6 + $0x2c]]
    %s1991 = sld [smem:[#allocation6 + $0x5d]]
    %v1992 = vstv %s1990
    %v1993 = vmul.f32 %v1992, %v104
    %v1994 = vmul.f32 %v1992, %v105
    %v1995 = vmul.f32 %v1992, %v106
    %v1996 = vmul.f32 %v1992, %v107
    %v1997 = vstv %s1991
    %v1998 = vmul.f32 %v1997, %v125
    %v1999 = vmul.f32 %v1997, %v132
    %v2000 = vmul.f32 %v1997, %v139
    %v2001 = vmul.f32 %v1997, %v146
    %v2002 = vadd.f32 %v1993, %v1998
    %v2003 = vadd.f32 %v1994, %v1999
    %v2004 = vadd.f32 %v1995, %v2000
    %v2005 = vadd.f32 %v1996, %v2001
    %v2010 = vsel %vm167, %v2004, %v2002
    %v2011 = vsel %vm167, %v2005, %v2003
    %2014 = vrot.lane.b32.xlu0 %v2010, 81
    %v2015 = vpop.permute.xlu0 %2014
    %2016 = vrot.lane.b32.xlu0 %v2011, 81
    %v2017 = vpop.permute.xlu0 %2016
    %vm2018 = vcmp.lt.s32.totalorder %v177, 81
    %v2019 = vsel %vm2018, %v2015, %v2017
    %v2020 = vsel %vm2018, %v2017, %v2015
    %s2021 = scalar_lea.vmem [#allocation7], 84
    %v2022 = vld [vmem:[%s2021] ss:$8 sm:$0x3]
    %v2024 = vperm.slane %v2022, 0
    %v2025 = vperm.slane %v2022, 1
    %v2028 = vmul.f32 %v2024, %v2019
    %v2029 = vmul.f32 %v2025, %v2020
    %v2030 = vadd.f32 %v1862, %v2028
    %v2031 = vadd.f32 %v1863, %v2029
    %s2032 = sld [smem:[#allocation6 + $0x2d]]
    %s2033 = sld [smem:[#allocation6 + $0x5e]]
    %v2034 = vstv %s2032
    %v2035 = vmul.f32 %v2034, %v104
    %v2036 = vmul.f32 %v2034, %v105
    %v2037 = vmul.f32 %v2034, %v106
    %v2038 = vmul.f32 %v2034, %v107
    %v2039 = vstv %s2033
    %v2040 = vmul.f32 %v2039, %v125
    %v2041 = vmul.f32 %v2039, %v132
    %v2042 = vmul.f32 %v2039, %v139
    %v2043 = vmul.f32 %v2039, %v146
    %v2044 = vadd.f32 %v2035, %v2040
    %v2045 = vadd.f32 %v2036, %v2041
    %v2046 = vadd.f32 %v2037, %v2042
    %v2047 = vadd.f32 %v2038, %v2043
    %v2052 = vsel %vm167, %v2046, %v2044
    %v2053 = vsel %vm167, %v2047, %v2045
    %2056 = vrot.lane.b32.xlu0 %v2052, 80
    %v2057 = vpop.permute.xlu0 %2056
    %2058 = vrot.lane.b32.xlu0 %v2053, 80
    %v2059 = vpop.permute.xlu0 %2058
    %vm2060 = vcmp.lt.s32.totalorder %v177, 80
    %v2061 = vsel %vm2060, %v2057, %v2059
    %v2062 = vsel %vm2060, %v2059, %v2057
    %s2063 = scalar_lea.vmem [#allocation7], 85
    %v2064 = vld [vmem:[%s2063] ss:$8 sm:$0x3]
    %v2066 = vperm.slane %v2064, 0
    %v2067 = vperm.slane %v2064, 1
    %v2070 = vmul.f32 %v2066, %v2061
    %v2071 = vmul.f32 %v2067, %v2062
    %v2072 = vadd.f32 %v1904, %v2070
    %v2073 = vadd.f32 %v1905, %v2071
    %s2074 = sld [smem:[#allocation6 + $0x2e]]
    %s2075 = sld [smem:[#allocation6 + $0x5f]]
    %v2076 = vstv %s2074
    %v2077 = vmul.f32 %v2076, %v104
    %v2078 = vmul.f32 %v2076, %v105
    %v2079 = vmul.f32 %v2076, %v106
    %v2080 = vmul.f32 %v2076, %v107
    %v2081 = vstv %s2075
    %v2082 = vmul.f32 %v2081, %v125
    %v2083 = vmul.f32 %v2081, %v132
    %v2084 = vmul.f32 %v2081, %v139
    %v2085 = vmul.f32 %v2081, %v146
    %v2086 = vadd.f32 %v2077, %v2082
    %v2087 = vadd.f32 %v2078, %v2083
    %v2088 = vadd.f32 %v2079, %v2084
    %v2089 = vadd.f32 %v2080, %v2085
    %v2094 = vsel %vm167, %v2088, %v2086
    %v2095 = vsel %vm167, %v2089, %v2087
    %2098 = vrot.lane.b32.xlu0 %v2094, 79
    %v2099 = vpop.permute.xlu0 %2098
    %2100 = vrot.lane.b32.xlu0 %v2095, 79
    %v2101 = vpop.permute.xlu0 %2100
    %vm2102 = vcmp.lt.s32.totalorder %v177, 79
    %v2103 = vsel %vm2102, %v2099, %v2101
    %v2104 = vsel %vm2102, %v2101, %v2099
    %s2105 = scalar_lea.vmem [#allocation7], 86
    %v2106 = vld [vmem:[%s2105] ss:$8 sm:$0x3]
    %v2108 = vperm.slane %v2106, 0
    %v2109 = vperm.slane %v2106, 1
    %v2112 = vmul.f32 %v2108, %v2103
    %v2113 = vmul.f32 %v2109, %v2104
    %v2114 = vadd.f32 %v1946, %v2112
    %v2115 = vadd.f32 %v1947, %v2113
    %s2116 = sld [smem:[#allocation6 + $0x2f]]
    %s2117 = sld [smem:[#allocation6 + $0x60]]
    %v2118 = vstv %s2116
    %v2119 = vmul.f32 %v2118, %v104
    %v2120 = vmul.f32 %v2118, %v105
    %v2121 = vmul.f32 %v2118, %v106
    %v2122 = vmul.f32 %v2118, %v107
    %v2123 = vstv %s2117
    %v2124 = vmul.f32 %v2123, %v125
    %v2125 = vmul.f32 %v2123, %v132
    %v2126 = vmul.f32 %v2123, %v139
    %v2127 = vmul.f32 %v2123, %v146
    %v2128 = vadd.f32 %v2119, %v2124
    %v2129 = vadd.f32 %v2120, %v2125
    %v2130 = vadd.f32 %v2121, %v2126
    %v2131 = vadd.f32 %v2122, %v2127
    %v2136 = vsel %vm167, %v2130, %v2128
    %v2137 = vsel %vm167, %v2131, %v2129
    %2140 = vrot.lane.b32.xlu0 %v2136, 78
    %v2141 = vpop.permute.xlu0 %2140
    %2142 = vrot.lane.b32.xlu0 %v2137, 78
    %v2143 = vpop.permute.xlu0 %2142
    %vm2144 = vcmp.lt.s32.totalorder %v177, 78
    %v2145 = vsel %vm2144, %v2141, %v2143
    %v2146 = vsel %vm2144, %v2143, %v2141
    %s2147 = scalar_lea.vmem [#allocation7], 87
    %v2148 = vld [vmem:[%s2147] ss:$8 sm:$0x3]
    %v2150 = vperm.slane %v2148, 0
    %v2151 = vperm.slane %v2148, 1
    %v2154 = vmul.f32 %v2150, %v2145
    %v2155 = vmul.f32 %v2151, %v2146
    %v2156 = vadd.f32 %v1988, %v2154
    %v2157 = vadd.f32 %v1989, %v2155
    %s2158 = sld [smem:[#allocation6 + $0x30]]
    %s2159 = sld [smem:[#allocation6 + $0x61]]
    %v2160 = vstv %s2158
    %v2161 = vmul.f32 %v2160, %v104
    %v2162 = vmul.f32 %v2160, %v105
    %v2163 = vmul.f32 %v2160, %v106
    %v2164 = vmul.f32 %v2160, %v107
    %v2165 = vstv %s2159
    %v2166 = vmul.f32 %v2165, %v125
    %v2167 = vmul.f32 %v2165, %v132
    %v2168 = vmul.f32 %v2165, %v139
    %v2169 = vmul.f32 %v2165, %v146
    %v2170 = vadd.f32 %v2161, %v2166
    %v2171 = vadd.f32 %v2162, %v2167
    %v2172 = vadd.f32 %v2163, %v2168
    %v2173 = vadd.f32 %v2164, %v2169
    %v2178 = vsel %vm167, %v2172, %v2170
    %v2179 = vsel %vm167, %v2173, %v2171
    %2182 = vrot.lane.b32.xlu0 %v2178, 77
    %v2183 = vpop.permute.xlu0 %2182
    %2184 = vrot.lane.b32.xlu0 %v2179, 77
    %v2185 = vpop.permute.xlu0 %2184
    %vm2186 = vcmp.lt.s32.totalorder %v177, 77
    %v2187 = vsel %vm2186, %v2183, %v2185
    %v2188 = vsel %vm2186, %v2185, %v2183
    %s2189 = scalar_lea.vmem [#allocation7], 96
    %v2190 = vld [vmem:[%s2189] ss:$8 sm:$0x3]
    %v2192 = vperm.slane %v2190, 0
    %v2193 = vperm.slane %v2190, 1
    %v2196 = vmul.f32 %v2192, %v2187
    %v2197 = vmul.f32 %v2193, %v2188
    %v2198 = vadd.f32 %v2030, %v2196
    %v2199 = vadd.f32 %v2031, %v2197
    %v2200 = vadd.f32 %v2198, %v2072
    %v2201 = vadd.f32 %v2199, %v2073
    %v2202 = vadd.f32 %v2114, %v2156
    %v2203 = vadd.f32 %v2115, %v2157
    %v2204 = vadd.f32 %v2200, %v2202
    %v2205 = vadd.f32 %v2201, %v2203
    %v2206 = vxor.u32 %v2204, 2147483648
    %v2207 = vxor.u32 %v2205, 2147483648
    %v2208 = vmul.f32 %v2206, 1.442695
    %v2209 = vpow.pop %v2208
    %v2210 = vmul.f32 %v2207, 1.442695
    %v2211 = vpow.pop %v2210
    %v2212 = vadd.f32 %v2209, 1.0
    %v2213 = vadd.f32 %v2211, 1.0
    %v2214 = vrcp.pop %v2212
    %v2215 = vmul.f32 %v2212, %v2214
    %v2216 = vsub.f32 1.0, %v2215
    %v2217 = vmul.f32 %v2214, %v2216
    %v2218 = vadd.f32 %v2214, %v2217
    %vm2219 = vweird.f32 %v2212
    %vm2220 = vweird.f32 %v2214
    %vm2221 = vmor %vm2219, %vm2220
    %v2222 = vsel %vm2221, %v2214, %v2218
    %v2223 = vand.u32 2147483647, %v2212
    %vm2224 = vcmp.eq.f32.partialorder %v2223, 8.507059e+37
    %v2225 = vand.u32 %v2212, 2147483648
    %v2226 = vor.u32 1.1754944e-38, %v2225
    %v2227 = vsel %vm2224, %v2226, %v2222
    %v2228 = vmul.f32 1.0, %v2227
    %v2229 = vrcp.pop %v2213
    %v2230 = vmul.f32 %v2213, %v2229
    %v2231 = vsub.f32 1.0, %v2230
    %v2232 = vmul.f32 %v2229, %v2231
    %v2233 = vadd.f32 %v2229, %v2232
    %vm2234 = vweird.f32 %v2213
    %vm2235 = vweird.f32 %v2229
    %vm2236 = vmor %vm2234, %vm2235
    %v2237 = vsel %vm2236, %v2229, %v2233
    %v2238 = vand.u32 2147483647, %v2213
    %vm2239 = vcmp.eq.f32.partialorder %v2238, 8.507059e+37
    %v2240 = vand.u32 %v2213, 2147483648
    %v2241 = vor.u32 1.1754944e-38, %v2240
    %v2242 = vsel %vm2239, %v2241, %v2237
    %v2243 = vmul.f32 1.0, %v2242
    %v2246 = vrot.slane %v2243, 7
    %vm2247 = vcmask 1040384
    %v2248 = vsel %vm2247, %v2228, %v2246
    %v2249 = vsel %vm167, %v2228, %v2246
    %v2250 = vrot.slane %v2249, 1
    %v2251 = vperm.slane %v2248, 0
    %v2252 = vperm.slane %v2248, 1
    %v2253 = vperm.slane %v2250, 0
    %v2254 = vperm.slane %v2250, 1
    %v2255 = vrot.slane %v2252, 4
    %v2256 = vrot.slane %v2254, 4
    %v2257 = vsel %vm75, %v2251, %v2255
    %v2258 = vsel %vm75, %v2253, %v2256
    %v2261 = vmul.f32 %v60, %v2257
    %v2262 = vmul.f32 %v61, %v2258
    %2263 = vst [vmem:[#allocation9] sm:$0xff] %v2261
    %2264 = vst [vmem:[#allocation9 + $0x8] sm:$0xff] %v2262
    // Predicated region
    $region26: #{tpu_custom_call.1} parent=1 // pred_check
      _
    $region27: #{tpu_custom_call.1} parent=1 // pred_check_branch
      %2266 = sbr.rel (0) target = $region29
    $region28: #{tpu_custom_call.1} parent=1 // pred_region
      %2268 = vsyncadd [#allocation4], 0
      %s2269 = sshll.u32 [#allocation9], 4
      %s2270 = int_to_ptr.vmem [resolvable:$true] %s2269
      %s2271 = sshll.u32 %s3, 4
      %s2272 = int_to_ptr.hbm [resolvable:$true] %s2271
      %2277 = dma.vmem_to_hbm [thread:$0]  %s2270, 256, %s2272, [#allocation4], 128, 128, 8
    $region29: #{tpu_custom_call.1} parent=1 // pred_fallthru
      _
    // Predicated region
    $region30: #{tpu_custom_call.1} parent=1 // pred_check
      _
    $region31: #{tpu_custom_call.1} parent=1 // pred_check_branch
      %2279 = sbr.rel (0) target = $region33
    $region32: #{tpu_custom_call.1} parent=1 // pred_region
      %2281 = dma.done [#allocation4], 256
    $region33: #{tpu_custom_call.1} parent=1 // pred_fallthru
      _
    %2282 = vsyncpa [#allocation3], 1
    %2283 = vsyncpa [#allocation8], 1
    %2284 = vsyncpa [#allocation4], 1
    %2285 = vsyncpa [#allocation5], 1

</llo_original>
